<compile_context>
chip_gen: v5e
topology: v5e:2x2
jax: 0.10.0
libtpu: 0.0.40
codegen_flags: <defaults>
</compile_context>

<pallas_src>
import functools

import jax
import jax.numpy as jnp
from jax.experimental import pallas as pl
from jax.experimental.pallas import tpu as pltpu


def _round_up(n, m):
    return ((n + m - 1) // m) * m


def _cdiv(a, b):
    return (a + b - 1) // b


def _default_min_grid_steps():
    # v7x has 2 TensorCores/chip: prefer >=2 "parallel" grid steps so both TCs are used.
    # v5e/v6e have 1 TC: a single big tile (no per-step overhead) is best.
    try:
        kind = jax.devices()[0].device_kind.lower()
        if "v7" in kind:
            return 2
    except Exception:
        pass
    return 1


def _make_lhi_kernel(shears, hidden, use_bf16_tanh=False):
    S = int(shears)
    H = int(hidden)
    stride = 3 * H + 1  # scalars per net in the SMEM weight vector

    def kernel(x_ref, w_ref, o_ref):
        # x_ref/o_ref: [2, R, 128] dense tiles (row 0 = p, row 1 = q); w_ref: SMEM f32[N*(3H+1)]
        p = x_ref[0, :, :].astype(jnp.float32)      # [R, 128] dense
        q = x_ref[1, :, :].astype(jnp.float32)      # [R, 128] dense

        def fcn(u, net_idx):
            # SmallFCN(1 -> H -> 1); the per-eval step coefficient magnitude is already folded
            # into w2/b2.  Scalar weights come from SMEM (cheap sld, hidden under EUP work);
            # the H-loop runs on fully dense [R,128] vregs -> no sublane padding, no lane
            # broadcasts, no sublane reduce.
            base = net_idx * stride
            acc = jnp.zeros_like(u)
            for hh in range(H):
                w1 = w_ref[base + hh]
                b1 = w_ref[base + H + hh]
                w2 = w_ref[base + 2 * H + hh]
                z = w1 * u + b1
                if use_bf16_tanh:
                    # TODO(synk): flag-gated reduced-precision tanh (v6e/v7x EUP bf16); off by
                    # default because it breaks the 1e-5 f32 tolerance (never enable on v5e).
                    t = jnp.tanh(z.astype(jnp.bfloat16)).astype(jnp.float32)
                else:
                    t = jnp.tanh(z)
                acc = acc + w2 * t
            return acc + w_ref[base + 3 * H]        # scaled b2

        PV, PH = 0, 1
        V0 = 2
        H0 = 2 + S

        # pre-processor (+h): coefficient magnitudes folded into weights, sign via -/+ below
        p = p - fcn(q, PV)
        q = q + fcn(p, PH)
        p = p - fcn(q, PV)
        # leapfrog core with learned shear banks (statically unrolled)
        for i in range(S):
            p = p - fcn(q, V0 + i)
            q = q + fcn(p, H0 + i)
            p = p - fcn(q, V0 + i)
        # post-processor (-h)
        p = p + fcn(q, PV)
        q = q - fcn(p, PH)
        p = p + fcn(q, PV)

        # dense full-tile stores (no masked 2-wide / single-sublane stores)
        o_ref[0, :, :] = p.astype(o_ref.dtype)
        o_ref[1, :, :] = q.astype(o_ref.dtype)

    return kernel


def _pack_weights_smem(params, h, shears, hidden):
    """Flat f32 vector for SMEM.  Per net: [w1(H), b1(H), w2*c(H), b2*c].

    Net order: proc_v, proc_h, v_nets[0..S), h_nets[0..S).  The step-coefficient magnitude c
    (0.5h for proc_v, h for proc_h, 0.5h/S for v_nets, h/S for h_nets) is folded in at pack
    time; the sign is applied by +/- in the kernel's statically unrolled updates.
    """
    h = float(h)
    S = int(shears)

    def net(w1, b1, w2, b2, c):
        return jnp.concatenate([
            w1.astype(jnp.float32),
            b1.astype(jnp.float32),
            (w2 * c).astype(jnp.float32),
            (b2 * c).reshape(1).astype(jnp.float32),
        ])

    blocks = [
        net(params["pw1"][0], params["pb1"][0], params["pw2"][0], params["pb2"][0], 0.5 * h),
        net(params["pw1"][1], params["pb1"][1], params["pw2"][1], params["pb2"][1], h),
    ]
    hi = h / S
    for i in range(S):
        blocks.append(net(params["vw1"][i], params["vb1"][i], params["vw2"][i], params["vb2"][i], 0.5 * hi))
    for i in range(S):
        blocks.append(net(params["hw1"][i], params["hb1"][i], params["hw2"][i], params["hb2"][i], hi))
    return jnp.concatenate(blocks)                  # f32[(2+2S)*(3H+1)]


def lhi_forward(x, params, *, h, shears, lanes=16384, min_grid_steps=None, use_bf16_tanh=False):
    """x: [B, 2] float32.  params: dict of stacked SmallFCN weights.  Returns [B, 2].

    `lanes` = max batch elements per grid step.  Tile selection is balanced (pad waste capped)
    and generation-aware: one big tile on 1-TC parts, >=2 parallel steps on v7x when B is
    large enough (multi-step tiles are multiples of 1024 so blocks stay (8,128)-aligned).
    """
    B, dim = x.shape
    assert dim == 2
    assert lanes >= 128
    H = params["pw1"].shape[1]
    S = int(shears)

    if min_grid_steps is None:
        min_grid_steps = _default_min_grid_steps()

    # ---- balanced, sublane/lane-dense tile selection ----
    n_steps = max(1, _cdiv(B, lanes))
    if min_grid_steps > 1 and B >= min_grid_steps * 1024:
        n_steps = max(n_steps, min_grid_steps)
    if n_steps == 1:
        tb = _round_up(B, 128)                      # single step: block == full array, any R ok
    else:
        tb = _round_up(_cdiv(B, n_steps), 1024)     # multi-step: rows per tile multiple of 8
        n_steps = _cdiv(B, tb)
        if n_steps == 1:
            tb = _round_up(B, 128)
    b_pad = n_steps * tb
    nrows = b_pad // 128
    rows_per_tile = tb // 128

    # pack x to [2, nrows, 128]: row 0 = p, row 1 = q; batch b -> (b // 128, b % 128)
    xt = jnp.zeros((2, b_pad), x.dtype).at[:, :B].set(x.T).reshape(2, nrows, 128)
    w_smem = _pack_weights_smem(params, h, S, H)

    kernel = _make_lhi_kernel(S, H, use_bf16_tanh=use_bf16_tanh)

    out = pl.pallas_call(
        kernel,
        out_shape=jax.ShapeDtypeStruct((2, nrows, 128), x.dtype),
        grid=(n_steps,),
        in_specs=[
            pl.BlockSpec((2, rows_per_tile, 128), lambda i: (0, i, 0)),   # dense x tile
            pl.BlockSpec(memory_space=pltpu.MemorySpace.SMEM),            # scalar weights
        ],
        out_specs=pl.BlockSpec((2, rows_per_tile, 128), lambda i: (0, i, 0)),
        compiler_params=pltpu.CompilerParams(dimension_semantics=("parallel",)),
    )(xt, w_smem)

    return out.reshape(2, b_pad)[:, :B].T


# ------------------------- pure-JAX reference (for correctness check) -------------------------

def _fcn_ref(u, w1, b1, w2, b2):
    hid = jnp.tanh(u * w1[None, :] + b1[None, :])
    return jnp.sum(hid * w2[None, :], axis=-1, keepdims=True) + b2[None, :]


def lhi_forward_ref(x, params, *, h, shears):
    p, q = x[:, 0:1], x[:, 1:2]

    def proc_v(u): return _fcn_ref(u, params["pw1"][0], params["pb1"][0], params["pw2"][0], params["pb2"][0])
    def proc_h(u): return _fcn_ref(u, params["pw1"][1], params["pb1"][1], params["pw2"][1], params["pb2"][1])
    def v_i(i, u): return _fcn_ref(u, params["vw1"][i], params["vb1"][i], params["vw2"][i], params["vb2"][i])
    def h_i_(i, u): return _fcn_ref(u, params["hw1"][i], params["hb1"][i], params["hw2"][i], params["hb2"][i])

    def processor(p, q, sign):
        hh, hf = 0.5 * sign * h, sign * h
        p = p - proc_v(q) * hh
        q = q + proc_h(p) * hf
        p = p - proc_v(q) * hh
        return p, q

    p, q = processor(p, q, 1.0)
    hi = h / shears
    for i in range(shears):
        p = p - v_i(i, q) * (hi * 0.5)
        q = q + h_i_(i, p) * hi
        p = p - v_i(i, q) * (hi * 0.5)
    p, q = processor(p, q, -1.0)
    return jnp.concatenate([p, q], axis=-1)


# ------------------------------------------- main --------------------------------------------

def _init_params(key, shears, hidden_dim):
    # deterministic synthetic weights matching SmallFCN(input_dim=1, hidden_dim) shapes:
    #   W1: [H,1] -> stored flattened as [H];  b1: [H];  W2: [1,H] -> stored as [H];  b2: [1]
    ks = jax.random.split(key, 12)
    H, S = hidden_dim, shears
    scale = 0.5
    return {
        "pw1": scale * jax.random.normal(ks[0], (2, H), jnp.float32),
        "pb1": scale * jax.random.normal(ks[1], (2, H), jnp.float32),
        "pw2": scale * jax.random.normal(ks[2], (2, H), jnp.float32),
        "pb2": scale * jax.random.normal(ks[3], (2, 1), jnp.float32),
        "vw1": scale * jax.random.normal(ks[4], (S, H), jnp.float32),
        "vb1": scale * jax.random.normal(ks[5], (S, H), jnp.float32),
        "vw2": scale * jax.random.normal(ks[6], (S, H), jnp.float32),
        "vb2": scale * jax.random.normal(ks[7], (S, 1), jnp.float32),
        "hw1": scale * jax.random.normal(ks[8], (S, H), jnp.float32),
        "hb1": scale * jax.random.normal(ks[9], (S, H), jnp.float32),
        "hw2": scale * jax.random.normal(ks[10], (S, H), jnp.float32),
        "hb2": scale * jax.random.normal(ks[11], (S, 1), jnp.float32),
    }


if __name__ == "__main__":
    H_STEP = 0.1     # LHI integration step h
    SHEARS = 3       # number of learned shear banks
    DIM = 2          # phase-space dim (p, q each scalar)
    HIDDEN = 6       # SmallFCN hidden_dim

    key = jax.random.PRNGKey(0)
    k_x, k_w, k_x2 = jax.random.split(key, 3)
    params = _init_params(k_w, SHEARS, HIDDEN)

    # 1) small batch: single lane-padded block (no grid overhead)
    B = 16
    x = jax.random.normal(k_x, (B, DIM), jnp.float32)
    fwd = jax.jit(functools.partial(lhi_forward, h=H_STEP, shears=SHEARS))
    out = jax.block_until_ready(fwd(x, params))
    ref = lhi_forward_ref(x, params, h=H_STEP, shears=SHEARS)
    assert out.shape == (B, DIM)
    assert jnp.allclose(out, ref, atol=1e-5, rtol=1e-5), "mismatch vs reference (small batch)"

    # 2) batch not a multiple of 128 and larger than `lanes`: exercises the multi-step grid,
    #    balanced tile selection, weight-resident SMEM operand and pad-tail slicing.
    B2 = 2300
    x2 = jax.random.normal(k_x2, (B2, DIM), jnp.float32)
    fwd2 = jax.jit(functools.partial(lhi_forward, h=H_STEP, shears=SHEARS, lanes=1024))
    out2 = jax.block_until_ready(fwd2(x2, params))
    ref2 = lhi_forward_ref(x2, params, h=H_STEP, shears=SHEARS)
    assert out2.shape == (B2, DIM)
    assert jnp.allclose(out2, ref2, atol=1e-5, rtol=1e-5), "mismatch vs reference (multi-step)"

    print("KERNEL_OK")
</pallas_src>

<mosaic_0001>
module attributes {stable_mosaic.version = 11 : i64} {
  func.func @kernel(%arg0: i32, %arg1: memref<2x1x128xf32, #tpu.memory_space<vmem>>, %arg2: memref<152xf32, #tpu.memory_space<smem>>, %arg3: memref<2x1x128xf32, #tpu.memory_space<vmem>>) attributes {dimension_semantics = [#tpu.dimension_semantics<parallel>], iteration_bounds = array<i64: 1>, scalar_prefetch = 0 : i64, scratch_operands = 0 : i64, tpu.core_type = #tpu.core_type<tc>, window_params = [{transform_indices = @transform_0, window_bounds = array<i64: 2, 1, 128>}, {transform_indices = @transform_1, window_bounds = array<i64: 152>}, {transform_indices = @transform_2, window_bounds = array<i64: 2, 1, 128>}]} {
    %c0 = arith.constant 0 : index
    %c0_0 = arith.constant 0 : index
    %c0_1 = arith.constant 0 : index
    %0 = vector.load %arg1[%c0, %c0_0, %c0_1] : memref<2x1x128xf32, #tpu.memory_space<vmem>>, vector<1x1x128xf32>
    %1 = vector.shape_cast %0 : vector<1x1x128xf32> to vector<1x128xf32>
    %c1 = arith.constant 1 : index
    %c0_2 = arith.constant 0 : index
    %c0_3 = arith.constant 0 : index
    %2 = vector.load %arg1[%c1, %c0_2, %c0_3] : memref<2x1x128xf32, #tpu.memory_space<vmem>>, vector<1x1x128xf32>
    %3 = vector.shape_cast %2 : vector<1x1x128xf32> to vector<1x128xf32>
    %cst = arith.constant 0.000000e+00 : f32
    %4 = vector.broadcast %cst : f32 to vector<1x128xf32>
    %c0_4 = arith.constant 0 : index
    %5 = memref.load %arg2[%c0_4] : memref<152xf32, #tpu.memory_space<smem>>
    %c6 = arith.constant 6 : index
    %6 = memref.load %arg2[%c6] : memref<152xf32, #tpu.memory_space<smem>>
    %c12 = arith.constant 12 : index
    %7 = memref.load %arg2[%c12] : memref<152xf32, #tpu.memory_space<smem>>
    %8 = vector.broadcast %5 : f32 to vector<1x128xf32>
    %9 = arith.mulf %8, %3 : vector<1x128xf32>
    %10 = vector.broadcast %6 : f32 to vector<1x128xf32>
    %11 = arith.addf %9, %10 : vector<1x128xf32>
    %12 = math.tanh %11 : vector<1x128xf32>
    %13 = vector.broadcast %7 : f32 to vector<1x128xf32>
    %14 = arith.mulf %13, %12 : vector<1x128xf32>
    %15 = arith.addf %4, %14 : vector<1x128xf32>
    %c1_5 = arith.constant 1 : index
    %16 = memref.load %arg2[%c1_5] : memref<152xf32, #tpu.memory_space<smem>>
    %c7 = arith.constant 7 : index
    %17 = memref.load %arg2[%c7] : memref<152xf32, #tpu.memory_space<smem>>
    %c13 = arith.constant 13 : index
    %18 = memref.load %arg2[%c13] : memref<152xf32, #tpu.memory_space<smem>>
    %19 = vector.broadcast %16 : f32 to vector<1x128xf32>
    %20 = arith.mulf %19, %3 : vector<1x128xf32>
    %21 = vector.broadcast %17 : f32 to vector<1x128xf32>
    %22 = arith.addf %20, %21 : vector<1x128xf32>
    %23 = math.tanh %22 : vector<1x128xf32>
    %24 = vector.broadcast %18 : f32 to vector<1x128xf32>
    %25 = arith.mulf %24, %23 : vector<1x128xf32>
    %26 = arith.addf %15, %25 : vector<1x128xf32>
    %c2 = arith.constant 2 : index
    %27 = memref.load %arg2[%c2] : memref<152xf32, #tpu.memory_space<smem>>
    %c8 = arith.constant 8 : index
    %28 = memref.load %arg2[%c8] : memref<152xf32, #tpu.memory_space<smem>>
    %c14 = arith.constant 14 : index
    %29 = memref.load %arg2[%c14] : memref<152xf32, #tpu.memory_space<smem>>
    %30 = vector.broadcast %27 : f32 to vector<1x128xf32>
    %31 = arith.mulf %30, %3 : vector<1x128xf32>
    %32 = vector.broadcast %28 : f32 to vector<1x128xf32>
    %33 = arith.addf %31, %32 : vector<1x128xf32>
    %34 = math.tanh %33 : vector<1x128xf32>
    %35 = vector.broadcast %29 : f32 to vector<1x128xf32>
    %36 = arith.mulf %35, %34 : vector<1x128xf32>
    %37 = arith.addf %26, %36 : vector<1x128xf32>
    %c3 = arith.constant 3 : index
    %38 = memref.load %arg2[%c3] : memref<152xf32, #tpu.memory_space<smem>>
    %c9 = arith.constant 9 : index
    %39 = memref.load %arg2[%c9] : memref<152xf32, #tpu.memory_space<smem>>
    %c15 = arith.constant 15 : index
    %40 = memref.load %arg2[%c15] : memref<152xf32, #tpu.memory_space<smem>>
    %41 = vector.broadcast %38 : f32 to vector<1x128xf32>
    %42 = arith.mulf %41, %3 : vector<1x128xf32>
    %43 = vector.broadcast %39 : f32 to vector<1x128xf32>
    %44 = arith.addf %42, %43 : vector<1x128xf32>
    %45 = math.tanh %44 : vector<1x128xf32>
    %46 = vector.broadcast %40 : f32 to vector<1x128xf32>
    %47 = arith.mulf %46, %45 : vector<1x128xf32>
    %48 = arith.addf %37, %47 : vector<1x128xf32>
    %c4 = arith.constant 4 : index
    %49 = memref.load %arg2[%c4] : memref<152xf32, #tpu.memory_space<smem>>
    %c10 = arith.constant 10 : index
    %50 = memref.load %arg2[%c10] : memref<152xf32, #tpu.memory_space<smem>>
    %c16 = arith.constant 16 : index
    %51 = memref.load %arg2[%c16] : memref<152xf32, #tpu.memory_space<smem>>
    %52 = vector.broadcast %49 : f32 to vector<1x128xf32>
    %53 = arith.mulf %52, %3 : vector<1x128xf32>
    %54 = vector.broadcast %50 : f32 to vector<1x128xf32>
    %55 = arith.addf %53, %54 : vector<1x128xf32>
    %56 = math.tanh %55 : vector<1x128xf32>
    %57 = vector.broadcast %51 : f32 to vector<1x128xf32>
    %58 = arith.mulf %57, %56 : vector<1x128xf32>
    %59 = arith.addf %48, %58 : vector<1x128xf32>
    %c5 = arith.constant 5 : index
    %60 = memref.load %arg2[%c5] : memref<152xf32, #tpu.memory_space<smem>>
    %c11 = arith.constant 11 : index
    %61 = memref.load %arg2[%c11] : memref<152xf32, #tpu.memory_space<smem>>
    %c17 = arith.constant 17 : index
    %62 = memref.load %arg2[%c17] : memref<152xf32, #tpu.memory_space<smem>>
    %63 = vector.broadcast %60 : f32 to vector<1x128xf32>
    %64 = arith.mulf %63, %3 : vector<1x128xf32>
    %65 = vector.broadcast %61 : f32 to vector<1x128xf32>
    %66 = arith.addf %64, %65 : vector<1x128xf32>
    %67 = math.tanh %66 : vector<1x128xf32>
    %68 = vector.broadcast %62 : f32 to vector<1x128xf32>
    %69 = arith.mulf %68, %67 : vector<1x128xf32>
    %70 = arith.addf %59, %69 : vector<1x128xf32>
    %c18 = arith.constant 18 : index
    %71 = memref.load %arg2[%c18] : memref<152xf32, #tpu.memory_space<smem>>
    %72 = vector.broadcast %71 : f32 to vector<1x128xf32>
    %73 = arith.addf %70, %72 : vector<1x128xf32>
    %74 = arith.subf %1, %73 : vector<1x128xf32>
    %cst_6 = arith.constant 0.000000e+00 : f32
    %75 = vector.broadcast %cst_6 : f32 to vector<1x128xf32>
    %c19 = arith.constant 19 : index
    %76 = memref.load %arg2[%c19] : memref<152xf32, #tpu.memory_space<smem>>
    %c25 = arith.constant 25 : index
    %77 = memref.load %arg2[%c25] : memref<152xf32, #tpu.memory_space<smem>>
    %c31 = arith.constant 31 : index
    %78 = memref.load %arg2[%c31] : memref<152xf32, #tpu.memory_space<smem>>
    %79 = vector.broadcast %76 : f32 to vector<1x128xf32>
    %80 = arith.mulf %79, %74 : vector<1x128xf32>
    %81 = vector.broadcast %77 : f32 to vector<1x128xf32>
    %82 = arith.addf %80, %81 : vector<1x128xf32>
    %83 = math.tanh %82 : vector<1x128xf32>
    %84 = vector.broadcast %78 : f32 to vector<1x128xf32>
    %85 = arith.mulf %84, %83 : vector<1x128xf32>
    %86 = arith.addf %75, %85 : vector<1x128xf32>
    %c20 = arith.constant 20 : index
    %87 = memref.load %arg2[%c20] : memref<152xf32, #tpu.memory_space<smem>>
    %c26 = arith.constant 26 : index
    %88 = memref.load %arg2[%c26] : memref<152xf32, #tpu.memory_space<smem>>
    %c32 = arith.constant 32 : index
    %89 = memref.load %arg2[%c32] : memref<152xf32, #tpu.memory_space<smem>>
    %90 = vector.broadcast %87 : f32 to vector<1x128xf32>
    %91 = arith.mulf %90, %74 : vector<1x128xf32>
    %92 = vector.broadcast %88 : f32 to vector<1x128xf32>
    %93 = arith.addf %91, %92 : vector<1x128xf32>
    %94 = math.tanh %93 : vector<1x128xf32>
    %95 = vector.broadcast %89 : f32 to vector<1x128xf32>
    %96 = arith.mulf %95, %94 : vector<1x128xf32>
    %97 = arith.addf %86, %96 : vector<1x128xf32>
    %c21 = arith.constant 21 : index
    %98 = memref.load %arg2[%c21] : memref<152xf32, #tpu.memory_space<smem>>
    %c27 = arith.constant 27 : index
    %99 = memref.load %arg2[%c27] : memref<152xf32, #tpu.memory_space<smem>>
    %c33 = arith.constant 33 : index
    %100 = memref.load %arg2[%c33] : memref<152xf32, #tpu.memory_space<smem>>
    %101 = vector.broadcast %98 : f32 to vector<1x128xf32>
    %102 = arith.mulf %101, %74 : vector<1x128xf32>
    %103 = vector.broadcast %99 : f32 to vector<1x128xf32>
    %104 = arith.addf %102, %103 : vector<1x128xf32>
    %105 = math.tanh %104 : vector<1x128xf32>
    %106 = vector.broadcast %100 : f32 to vector<1x128xf32>
    %107 = arith.mulf %106, %105 : vector<1x128xf32>
    %108 = arith.addf %97, %107 : vector<1x128xf32>
    %c22 = arith.constant 22 : index
    %109 = memref.load %arg2[%c22] : memref<152xf32, #tpu.memory_space<smem>>
    %c28 = arith.constant 28 : index
    %110 = memref.load %arg2[%c28] : memref<152xf32, #tpu.memory_space<smem>>
    %c34 = arith.constant 34 : index
    %111 = memref.load %arg2[%c34] : memref<152xf32, #tpu.memory_space<smem>>
    %112 = vector.broadcast %109 : f32 to vector<1x128xf32>
    %113 = arith.mulf %112, %74 : vector<1x128xf32>
    %114 = vector.broadcast %110 : f32 to vector<1x128xf32>
    %115 = arith.addf %113, %114 : vector<1x128xf32>
    %116 = math.tanh %115 : vector<1x128xf32>
    %117 = vector.broadcast %111 : f32 to vector<1x128xf32>
    %118 = arith.mulf %117, %116 : vector<1x128xf32>
    %119 = arith.addf %108, %118 : vector<1x128xf32>
    %c23 = arith.constant 23 : index
    %120 = memref.load %arg2[%c23] : memref<152xf32, #tpu.memory_space<smem>>
    %c29 = arith.constant 29 : index
    %121 = memref.load %arg2[%c29] : memref<152xf32, #tpu.memory_space<smem>>
    %c35 = arith.constant 35 : index
    %122 = memref.load %arg2[%c35] : memref<152xf32, #tpu.memory_space<smem>>
    %123 = vector.broadcast %120 : f32 to vector<1x128xf32>
    %124 = arith.mulf %123, %74 : vector<1x128xf32>
    %125 = vector.broadcast %121 : f32 to vector<1x128xf32>
    %126 = arith.addf %124, %125 : vector<1x128xf32>
    %127 = math.tanh %126 : vector<1x128xf32>
    %128 = vector.broadcast %122 : f32 to vector<1x128xf32>
    %129 = arith.mulf %128, %127 : vector<1x128xf32>
    %130 = arith.addf %119, %129 : vector<1x128xf32>
    %c24 = arith.constant 24 : index
    %131 = memref.load %arg2[%c24] : memref<152xf32, #tpu.memory_space<smem>>
    %c30 = arith.constant 30 : index
    %132 = memref.load %arg2[%c30] : memref<152xf32, #tpu.memory_space<smem>>
    %c36 = arith.constant 36 : index
    %133 = memref.load %arg2[%c36] : memref<152xf32, #tpu.memory_space<smem>>
    %134 = vector.broadcast %131 : f32 to vector<1x128xf32>
    %135 = arith.mulf %134, %74 : vector<1x128xf32>
    %136 = vector.broadcast %132 : f32 to vector<1x128xf32>
    %137 = arith.addf %135, %136 : vector<1x128xf32>
    %138 = math.tanh %137 : vector<1x128xf32>
    %139 = vector.broadcast %133 : f32 to vector<1x128xf32>
    %140 = arith.mulf %139, %138 : vector<1x128xf32>
    %141 = arith.addf %130, %140 : vector<1x128xf32>
    %c37 = arith.constant 37 : index
    %142 = memref.load %arg2[%c37] : memref<152xf32, #tpu.memory_space<smem>>
    %143 = vector.broadcast %142 : f32 to vector<1x128xf32>
    %144 = arith.addf %141, %143 : vector<1x128xf32>
    %145 = arith.addf %3, %144 : vector<1x128xf32>
    %cst_7 = arith.constant 0.000000e+00 : f32
    %146 = vector.broadcast %cst_7 : f32 to vector<1x128xf32>
    %c0_8 = arith.constant 0 : index
    %147 = memref.load %arg2[%c0_8] : memref<152xf32, #tpu.memory_space<smem>>
    %c6_9 = arith.constant 6 : index
    %148 = memref.load %arg2[%c6_9] : memref<152xf32, #tpu.memory_space<smem>>
    %c12_10 = arith.constant 12 : index
    %149 = memref.load %arg2[%c12_10] : memref<152xf32, #tpu.memory_space<smem>>
    %150 = vector.broadcast %147 : f32 to vector<1x128xf32>
    %151 = arith.mulf %150, %145 : vector<1x128xf32>
    %152 = vector.broadcast %148 : f32 to vector<1x128xf32>
    %153 = arith.addf %151, %152 : vector<1x128xf32>
    %154 = math.tanh %153 : vector<1x128xf32>
    %155 = vector.broadcast %149 : f32 to vector<1x128xf32>
    %156 = arith.mulf %155, %154 : vector<1x128xf32>
    %157 = arith.addf %146, %156 : vector<1x128xf32>
    %c1_11 = arith.constant 1 : index
    %158 = memref.load %arg2[%c1_11] : memref<152xf32, #tpu.memory_space<smem>>
    %c7_12 = arith.constant 7 : index
    %159 = memref.load %arg2[%c7_12] : memref<152xf32, #tpu.memory_space<smem>>
    %c13_13 = arith.constant 13 : index
    %160 = memref.load %arg2[%c13_13] : memref<152xf32, #tpu.memory_space<smem>>
    %161 = vector.broadcast %158 : f32 to vector<1x128xf32>
    %162 = arith.mulf %161, %145 : vector<1x128xf32>
    %163 = vector.broadcast %159 : f32 to vector<1x128xf32>
    %164 = arith.addf %162, %163 : vector<1x128xf32>
    %165 = math.tanh %164 : vector<1x128xf32>
    %166 = vector.broadcast %160 : f32 to vector<1x128xf32>
    %167 = arith.mulf %166, %165 : vector<1x128xf32>
    %168 = arith.addf %157, %167 : vector<1x128xf32>
    %c2_14 = arith.constant 2 : index
    %169 = memref.load %arg2[%c2_14] : memref<152xf32, #tpu.memory_space<smem>>
    %c8_15 = arith.constant 8 : index
    %170 = memref.load %arg2[%c8_15] : memref<152xf32, #tpu.memory_space<smem>>
    %c14_16 = arith.constant 14 : index
    %171 = memref.load %arg2[%c14_16] : memref<152xf32, #tpu.memory_space<smem>>
    %172 = vector.broadcast %169 : f32 to vector<1x128xf32>
    %173 = arith.mulf %172, %145 : vector<1x128xf32>
    %174 = vector.broadcast %170 : f32 to vector<1x128xf32>
    %175 = arith.addf %173, %174 : vector<1x128xf32>
    %176 = math.tanh %175 : vector<1x128xf32>
    %177 = vector.broadcast %171 : f32 to vector<1x128xf32>
    %178 = arith.mulf %177, %176 : vector<1x128xf32>
    %179 = arith.addf %168, %178 : vector<1x128xf32>
    %c3_17 = arith.constant 3 : index
    %180 = memref.load %arg2[%c3_17] : memref<152xf32, #tpu.memory_space<smem>>
    %c9_18 = arith.constant 9 : index
    %181 = memref.load %arg2[%c9_18] : memref<152xf32, #tpu.memory_space<smem>>
    %c15_19 = arith.constant 15 : index
    %182 = memref.load %arg2[%c15_19] : memref<152xf32, #tpu.memory_space<smem>>
    %183 = vector.broadcast %180 : f32 to vector<1x128xf32>
    %184 = arith.mulf %183, %145 : vector<1x128xf32>
    %185 = vector.broadcast %181 : f32 to vector<1x128xf32>
    %186 = arith.addf %184, %185 : vector<1x128xf32>
    %187 = math.tanh %186 : vector<1x128xf32>
    %188 = vector.broadcast %182 : f32 to vector<1x128xf32>
    %189 = arith.mulf %188, %187 : vector<1x128xf32>
    %190 = arith.addf %179, %189 : vector<1x128xf32>
    %c4_20 = arith.constant 4 : index
    %191 = memref.load %arg2[%c4_20] : memref<152xf32, #tpu.memory_space<smem>>
    %c10_21 = arith.constant 10 : index
    %192 = memref.load %arg2[%c10_21] : memref<152xf32, #tpu.memory_space<smem>>
    %c16_22 = arith.constant 16 : index
    %193 = memref.load %arg2[%c16_22] : memref<152xf32, #tpu.memory_space<smem>>
    %194 = vector.broadcast %191 : f32 to vector<1x128xf32>
    %195 = arith.mulf %194, %145 : vector<1x128xf32>
    %196 = vector.broadcast %192 : f32 to vector<1x128xf32>
    %197 = arith.addf %195, %196 : vector<1x128xf32>
    %198 = math.tanh %197 : vector<1x128xf32>
    %199 = vector.broadcast %193 : f32 to vector<1x128xf32>
    %200 = arith.mulf %199, %198 : vector<1x128xf32>
    %201 = arith.addf %190, %200 : vector<1x128xf32>
    %c5_23 = arith.constant 5 : index
    %202 = memref.load %arg2[%c5_23] : memref<152xf32, #tpu.memory_space<smem>>
    %c11_24 = arith.constant 11 : index
    %203 = memref.load %arg2[%c11_24] : memref<152xf32, #tpu.memory_space<smem>>
    %c17_25 = arith.constant 17 : index
    %204 = memref.load %arg2[%c17_25] : memref<152xf32, #tpu.memory_space<smem>>
    %205 = vector.broadcast %202 : f32 to vector<1x128xf32>
    %206 = arith.mulf %205, %145 : vector<1x128xf32>
    %207 = vector.broadcast %203 : f32 to vector<1x128xf32>
    %208 = arith.addf %206, %207 : vector<1x128xf32>
    %209 = math.tanh %208 : vector<1x128xf32>
    %210 = vector.broadcast %204 : f32 to vector<1x128xf32>
    %211 = arith.mulf %210, %209 : vector<1x128xf32>
    %212 = arith.addf %201, %211 : vector<1x128xf32>
    %c18_26 = arith.constant 18 : index
    %213 = memref.load %arg2[%c18_26] : memref<152xf32, #tpu.memory_space<smem>>
    %214 = vector.broadcast %213 : f32 to vector<1x128xf32>
    %215 = arith.addf %212, %214 : vector<1x128xf32>
    %216 = arith.subf %74, %215 : vector<1x128xf32>
    %cst_27 = arith.constant 0.000000e+00 : f32
    %217 = vector.broadcast %cst_27 : f32 to vector<1x128xf32>
    %c38 = arith.constant 38 : index
    %218 = memref.load %arg2[%c38] : memref<152xf32, #tpu.memory_space<smem>>
    %c44 = arith.constant 44 : index
    %219 = memref.load %arg2[%c44] : memref<152xf32, #tpu.memory_space<smem>>
    %c50 = arith.constant 50 : index
    %220 = memref.load %arg2[%c50] : memref<152xf32, #tpu.memory_space<smem>>
    %221 = vector.broadcast %218 : f32 to vector<1x128xf32>
    %222 = arith.mulf %221, %145 : vector<1x128xf32>
    %223 = vector.broadcast %219 : f32 to vector<1x128xf32>
    %224 = arith.addf %222, %223 : vector<1x128xf32>
    %225 = math.tanh %224 : vector<1x128xf32>
    %226 = vector.broadcast %220 : f32 to vector<1x128xf32>
    %227 = arith.mulf %226, %225 : vector<1x128xf32>
    %228 = arith.addf %217, %227 : vector<1x128xf32>
    %c39 = arith.constant 39 : index
    %229 = memref.load %arg2[%c39] : memref<152xf32, #tpu.memory_space<smem>>
    %c45 = arith.constant 45 : index
    %230 = memref.load %arg2[%c45] : memref<152xf32, #tpu.memory_space<smem>>
    %c51 = arith.constant 51 : index
    %231 = memref.load %arg2[%c51] : memref<152xf32, #tpu.memory_space<smem>>
    %232 = vector.broadcast %229 : f32 to vector<1x128xf32>
    %233 = arith.mulf %232, %145 : vector<1x128xf32>
    %234 = vector.broadcast %230 : f32 to vector<1x128xf32>
    %235 = arith.addf %233, %234 : vector<1x128xf32>
    %236 = math.tanh %235 : vector<1x128xf32>
    %237 = vector.broadcast %231 : f32 to vector<1x128xf32>
    %238 = arith.mulf %237, %236 : vector<1x128xf32>
    %239 = arith.addf %228, %238 : vector<1x128xf32>
    %c40 = arith.constant 40 : index
    %240 = memref.load %arg2[%c40] : memref<152xf32, #tpu.memory_space<smem>>
    %c46 = arith.constant 46 : index
    %241 = memref.load %arg2[%c46] : memref<152xf32, #tpu.memory_space<smem>>
    %c52 = arith.constant 52 : index
    %242 = memref.load %arg2[%c52] : memref<152xf32, #tpu.memory_space<smem>>
    %243 = vector.broadcast %240 : f32 to vector<1x128xf32>
    %244 = arith.mulf %243, %145 : vector<1x128xf32>
    %245 = vector.broadcast %241 : f32 to vector<1x128xf32>
    %246 = arith.addf %244, %245 : vector<1x128xf32>
    %247 = math.tanh %246 : vector<1x128xf32>
    %248 = vector.broadcast %242 : f32 to vector<1x128xf32>
    %249 = arith.mulf %248, %247 : vector<1x128xf32>
    %250 = arith.addf %239, %249 : vector<1x128xf32>
    %c41 = arith.constant 41 : index
    %251 = memref.load %arg2[%c41] : memref<152xf32, #tpu.memory_space<smem>>
    %c47 = arith.constant 47 : index
    %252 = memref.load %arg2[%c47] : memref<152xf32, #tpu.memory_space<smem>>
    %c53 = arith.constant 53 : index
    %253 = memref.load %arg2[%c53] : memref<152xf32, #tpu.memory_space<smem>>
    %254 = vector.broadcast %251 : f32 to vector<1x128xf32>
    %255 = arith.mulf %254, %145 : vector<1x128xf32>
    %256 = vector.broadcast %252 : f32 to vector<1x128xf32>
    %257 = arith.addf %255, %256 : vector<1x128xf32>
    %258 = math.tanh %257 : vector<1x128xf32>
    %259 = vector.broadcast %253 : f32 to vector<1x128xf32>
    %260 = arith.mulf %259, %258 : vector<1x128xf32>
    %261 = arith.addf %250, %260 : vector<1x128xf32>
    %c42 = arith.constant 42 : index
    %262 = memref.load %arg2[%c42] : memref<152xf32, #tpu.memory_space<smem>>
    %c48 = arith.constant 48 : index
    %263 = memref.load %arg2[%c48] : memref<152xf32, #tpu.memory_space<smem>>
    %c54 = arith.constant 54 : index
    %264 = memref.load %arg2[%c54] : memref<152xf32, #tpu.memory_space<smem>>
    %265 = vector.broadcast %262 : f32 to vector<1x128xf32>
    %266 = arith.mulf %265, %145 : vector<1x128xf32>
    %267 = vector.broadcast %263 : f32 to vector<1x128xf32>
    %268 = arith.addf %266, %267 : vector<1x128xf32>
    %269 = math.tanh %268 : vector<1x128xf32>
    %270 = vector.broadcast %264 : f32 to vector<1x128xf32>
    %271 = arith.mulf %270, %269 : vector<1x128xf32>
    %272 = arith.addf %261, %271 : vector<1x128xf32>
    %c43 = arith.constant 43 : index
    %273 = memref.load %arg2[%c43] : memref<152xf32, #tpu.memory_space<smem>>
    %c49 = arith.constant 49 : index
    %274 = memref.load %arg2[%c49] : memref<152xf32, #tpu.memory_space<smem>>
    %c55 = arith.constant 55 : index
    %275 = memref.load %arg2[%c55] : memref<152xf32, #tpu.memory_space<smem>>
    %276 = vector.broadcast %273 : f32 to vector<1x128xf32>
    %277 = arith.mulf %276, %145 : vector<1x128xf32>
    %278 = vector.broadcast %274 : f32 to vector<1x128xf32>
    %279 = arith.addf %277, %278 : vector<1x128xf32>
    %280 = math.tanh %279 : vector<1x128xf32>
    %281 = vector.broadcast %275 : f32 to vector<1x128xf32>
    %282 = arith.mulf %281, %280 : vector<1x128xf32>
    %283 = arith.addf %272, %282 : vector<1x128xf32>
    %c56 = arith.constant 56 : index
    %284 = memref.load %arg2[%c56] : memref<152xf32, #tpu.memory_space<smem>>
    %285 = vector.broadcast %284 : f32 to vector<1x128xf32>
    %286 = arith.addf %283, %285 : vector<1x128xf32>
    %287 = arith.subf %216, %286 : vector<1x128xf32>
    %cst_28 = arith.constant 0.000000e+00 : f32
    %288 = vector.broadcast %cst_28 : f32 to vector<1x128xf32>
    %c95 = arith.constant 95 : index
    %289 = memref.load %arg2[%c95] : memref<152xf32, #tpu.memory_space<smem>>
    %c101 = arith.constant 101 : index
    %290 = memref.load %arg2[%c101] : memref<152xf32, #tpu.memory_space<smem>>
    %c107 = arith.constant 107 : index
    %291 = memref.load %arg2[%c107] : memref<152xf32, #tpu.memory_space<smem>>
    %292 = vector.broadcast %289 : f32 to vector<1x128xf32>
    %293 = arith.mulf %292, %287 : vector<1x128xf32>
    %294 = vector.broadcast %290 : f32 to vector<1x128xf32>
    %295 = arith.addf %293, %294 : vector<1x128xf32>
    %296 = math.tanh %295 : vector<1x128xf32>
    %297 = vector.broadcast %291 : f32 to vector<1x128xf32>
    %298 = arith.mulf %297, %296 : vector<1x128xf32>
    %299 = arith.addf %288, %298 : vector<1x128xf32>
    %c96 = arith.constant 96 : index
    %300 = memref.load %arg2[%c96] : memref<152xf32, #tpu.memory_space<smem>>
    %c102 = arith.constant 102 : index
    %301 = memref.load %arg2[%c102] : memref<152xf32, #tpu.memory_space<smem>>
    %c108 = arith.constant 108 : index
    %302 = memref.load %arg2[%c108] : memref<152xf32, #tpu.memory_space<smem>>
    %303 = vector.broadcast %300 : f32 to vector<1x128xf32>
    %304 = arith.mulf %303, %287 : vector<1x128xf32>
    %305 = vector.broadcast %301 : f32 to vector<1x128xf32>
    %306 = arith.addf %304, %305 : vector<1x128xf32>
    %307 = math.tanh %306 : vector<1x128xf32>
    %308 = vector.broadcast %302 : f32 to vector<1x128xf32>
    %309 = arith.mulf %308, %307 : vector<1x128xf32>
    %310 = arith.addf %299, %309 : vector<1x128xf32>
    %c97 = arith.constant 97 : index
    %311 = memref.load %arg2[%c97] : memref<152xf32, #tpu.memory_space<smem>>
    %c103 = arith.constant 103 : index
    %312 = memref.load %arg2[%c103] : memref<152xf32, #tpu.memory_space<smem>>
    %c109 = arith.constant 109 : index
    %313 = memref.load %arg2[%c109] : memref<152xf32, #tpu.memory_space<smem>>
    %314 = vector.broadcast %311 : f32 to vector<1x128xf32>
    %315 = arith.mulf %314, %287 : vector<1x128xf32>
    %316 = vector.broadcast %312 : f32 to vector<1x128xf32>
    %317 = arith.addf %315, %316 : vector<1x128xf32>
    %318 = math.tanh %317 : vector<1x128xf32>
    %319 = vector.broadcast %313 : f32 to vector<1x128xf32>
    %320 = arith.mulf %319, %318 : vector<1x128xf32>
    %321 = arith.addf %310, %320 : vector<1x128xf32>
    %c98 = arith.constant 98 : index
    %322 = memref.load %arg2[%c98] : memref<152xf32, #tpu.memory_space<smem>>
    %c104 = arith.constant 104 : index
    %323 = memref.load %arg2[%c104] : memref<152xf32, #tpu.memory_space<smem>>
    %c110 = arith.constant 110 : index
    %324 = memref.load %arg2[%c110] : memref<152xf32, #tpu.memory_space<smem>>
    %325 = vector.broadcast %322 : f32 to vector<1x128xf32>
    %326 = arith.mulf %325, %287 : vector<1x128xf32>
    %327 = vector.broadcast %323 : f32 to vector<1x128xf32>
    %328 = arith.addf %326, %327 : vector<1x128xf32>
    %329 = math.tanh %328 : vector<1x128xf32>
    %330 = vector.broadcast %324 : f32 to vector<1x128xf32>
    %331 = arith.mulf %330, %329 : vector<1x128xf32>
    %332 = arith.addf %321, %331 : vector<1x128xf32>
    %c99 = arith.constant 99 : index
    %333 = memref.load %arg2[%c99] : memref<152xf32, #tpu.memory_space<smem>>
    %c105 = arith.constant 105 : index
    %334 = memref.load %arg2[%c105] : memref<152xf32, #tpu.memory_space<smem>>
    %c111 = arith.constant 111 : index
    %335 = memref.load %arg2[%c111] : memref<152xf32, #tpu.memory_space<smem>>
    %336 = vector.broadcast %333 : f32 to vector<1x128xf32>
    %337 = arith.mulf %336, %287 : vector<1x128xf32>
    %338 = vector.broadcast %334 : f32 to vector<1x128xf32>
    %339 = arith.addf %337, %338 : vector<1x128xf32>
    %340 = math.tanh %339 : vector<1x128xf32>
    %341 = vector.broadcast %335 : f32 to vector<1x128xf32>
    %342 = arith.mulf %341, %340 : vector<1x128xf32>
    %343 = arith.addf %332, %342 : vector<1x128xf32>
    %c100 = arith.constant 100 : index
    %344 = memref.load %arg2[%c100] : memref<152xf32, #tpu.memory_space<smem>>
    %c106 = arith.constant 106 : index
    %345 = memref.load %arg2[%c106] : memref<152xf32, #tpu.memory_space<smem>>
    %c112 = arith.constant 112 : index
    %346 = memref.load %arg2[%c112] : memref<152xf32, #tpu.memory_space<smem>>
    %347 = vector.broadcast %344 : f32 to vector<1x128xf32>
    %348 = arith.mulf %347, %287 : vector<1x128xf32>
    %349 = vector.broadcast %345 : f32 to vector<1x128xf32>
    %350 = arith.addf %348, %349 : vector<1x128xf32>
    %351 = math.tanh %350 : vector<1x128xf32>
    %352 = vector.broadcast %346 : f32 to vector<1x128xf32>
    %353 = arith.mulf %352, %351 : vector<1x128xf32>
    %354 = arith.addf %343, %353 : vector<1x128xf32>
    %c113 = arith.constant 113 : index
    %355 = memref.load %arg2[%c113] : memref<152xf32, #tpu.memory_space<smem>>
    %356 = vector.broadcast %355 : f32 to vector<1x128xf32>
    %357 = arith.addf %354, %356 : vector<1x128xf32>
    %358 = arith.addf %145, %357 : vector<1x128xf32>
    %cst_29 = arith.constant 0.000000e+00 : f32
    %359 = vector.broadcast %cst_29 : f32 to vector<1x128xf32>
    %c38_30 = arith.constant 38 : index
    %360 = memref.load %arg2[%c38_30] : memref<152xf32, #tpu.memory_space<smem>>
    %c44_31 = arith.constant 44 : index
    %361 = memref.load %arg2[%c44_31] : memref<152xf32, #tpu.memory_space<smem>>
    %c50_32 = arith.constant 50 : index
    %362 = memref.load %arg2[%c50_32] : memref<152xf32, #tpu.memory_space<smem>>
    %363 = vector.broadcast %360 : f32 to vector<1x128xf32>
    %364 = arith.mulf %363, %358 : vector<1x128xf32>
    %365 = vector.broadcast %361 : f32 to vector<1x128xf32>
    %366 = arith.addf %364, %365 : vector<1x128xf32>
    %367 = math.tanh %366 : vector<1x128xf32>
    %368 = vector.broadcast %362 : f32 to vector<1x128xf32>
    %369 = arith.mulf %368, %367 : vector<1x128xf32>
    %370 = arith.addf %359, %369 : vector<1x128xf32>
    %c39_33 = arith.constant 39 : index
    %371 = memref.load %arg2[%c39_33] : memref<152xf32, #tpu.memory_space<smem>>
    %c45_34 = arith.constant 45 : index
    %372 = memref.load %arg2[%c45_34] : memref<152xf32, #tpu.memory_space<smem>>
    %c51_35 = arith.constant 51 : index
    %373 = memref.load %arg2[%c51_35] : memref<152xf32, #tpu.memory_space<smem>>
    %374 = vector.broadcast %371 : f32 to vector<1x128xf32>
    %375 = arith.mulf %374, %358 : vector<1x128xf32>
    %376 = vector.broadcast %372 : f32 to vector<1x128xf32>
    %377 = arith.addf %375, %376 : vector<1x128xf32>
    %378 = math.tanh %377 : vector<1x128xf32>
    %379 = vector.broadcast %373 : f32 to vector<1x128xf32>
    %380 = arith.mulf %379, %378 : vector<1x128xf32>
    %381 = arith.addf %370, %380 : vector<1x128xf32>
    %c40_36 = arith.constant 40 : index
    %382 = memref.load %arg2[%c40_36] : memref<152xf32, #tpu.memory_space<smem>>
    %c46_37 = arith.constant 46 : index
    %383 = memref.load %arg2[%c46_37] : memref<152xf32, #tpu.memory_space<smem>>
    %c52_38 = arith.constant 52 : index
    %384 = memref.load %arg2[%c52_38] : memref<152xf32, #tpu.memory_space<smem>>
    %385 = vector.broadcast %382 : f32 to vector<1x128xf32>
    %386 = arith.mulf %385, %358 : vector<1x128xf32>
    %387 = vector.broadcast %383 : f32 to vector<1x128xf32>
    %388 = arith.addf %386, %387 : vector<1x128xf32>
    %389 = math.tanh %388 : vector<1x128xf32>
    %390 = vector.broadcast %384 : f32 to vector<1x128xf32>
    %391 = arith.mulf %390, %389 : vector<1x128xf32>
    %392 = arith.addf %381, %391 : vector<1x128xf32>
    %c41_39 = arith.constant 41 : index
    %393 = memref.load %arg2[%c41_39] : memref<152xf32, #tpu.memory_space<smem>>
    %c47_40 = arith.constant 47 : index
    %394 = memref.load %arg2[%c47_40] : memref<152xf32, #tpu.memory_space<smem>>
    %c53_41 = arith.constant 53 : index
    %395 = memref.load %arg2[%c53_41] : memref<152xf32, #tpu.memory_space<smem>>
    %396 = vector.broadcast %393 : f32 to vector<1x128xf32>
    %397 = arith.mulf %396, %358 : vector<1x128xf32>
    %398 = vector.broadcast %394 : f32 to vector<1x128xf32>
    %399 = arith.addf %397, %398 : vector<1x128xf32>
    %400 = math.tanh %399 : vector<1x128xf32>
    %401 = vector.broadcast %395 : f32 to vector<1x128xf32>
    %402 = arith.mulf %401, %400 : vector<1x128xf32>
    %403 = arith.addf %392, %402 : vector<1x128xf32>
    %c42_42 = arith.constant 42 : index
    %404 = memref.load %arg2[%c42_42] : memref<152xf32, #tpu.memory_space<smem>>
    %c48_43 = arith.constant 48 : index
    %405 = memref.load %arg2[%c48_43] : memref<152xf32, #tpu.memory_space<smem>>
    %c54_44 = arith.constant 54 : index
    %406 = memref.load %arg2[%c54_44] : memref<152xf32, #tpu.memory_space<smem>>
    %407 = vector.broadcast %404 : f32 to vector<1x128xf32>
    %408 = arith.mulf %407, %358 : vector<1x128xf32>
    %409 = vector.broadcast %405 : f32 to vector<1x128xf32>
    %410 = arith.addf %408, %409 : vector<1x128xf32>
    %411 = math.tanh %410 : vector<1x128xf32>
    %412 = vector.broadcast %406 : f32 to vector<1x128xf32>
    %413 = arith.mulf %412, %411 : vector<1x128xf32>
    %414 = arith.addf %403, %413 : vector<1x128xf32>
    %c43_45 = arith.constant 43 : index
    %415 = memref.load %arg2[%c43_45] : memref<152xf32, #tpu.memory_space<smem>>
    %c49_46 = arith.constant 49 : index
    %416 = memref.load %arg2[%c49_46] : memref<152xf32, #tpu.memory_space<smem>>
    %c55_47 = arith.constant 55 : index
    %417 = memref.load %arg2[%c55_47] : memref<152xf32, #tpu.memory_space<smem>>
    %418 = vector.broadcast %415 : f32 to vector<1x128xf32>
    %419 = arith.mulf %418, %358 : vector<1x128xf32>
    %420 = vector.broadcast %416 : f32 to vector<1x128xf32>
    %421 = arith.addf %419, %420 : vector<1x128xf32>
    %422 = math.tanh %421 : vector<1x128xf32>
    %423 = vector.broadcast %417 : f32 to vector<1x128xf32>
    %424 = arith.mulf %423, %422 : vector<1x128xf32>
    %425 = arith.addf %414, %424 : vector<1x128xf32>
    %c56_48 = arith.constant 56 : index
    %426 = memref.load %arg2[%c56_48] : memref<152xf32, #tpu.memory_space<smem>>
    %427 = vector.broadcast %426 : f32 to vector<1x128xf32>
    %428 = arith.addf %425, %427 : vector<1x128xf32>
    %429 = arith.subf %287, %428 : vector<1x128xf32>
    %cst_49 = arith.constant 0.000000e+00 : f32
    %430 = vector.broadcast %cst_49 : f32 to vector<1x128xf32>
    %c57 = arith.constant 57 : index
    %431 = memref.load %arg2[%c57] : memref<152xf32, #tpu.memory_space<smem>>
    %c63 = arith.constant 63 : index
    %432 = memref.load %arg2[%c63] : memref<152xf32, #tpu.memory_space<smem>>
    %c69 = arith.constant 69 : index
    %433 = memref.load %arg2[%c69] : memref<152xf32, #tpu.memory_space<smem>>
    %434 = vector.broadcast %431 : f32 to vector<1x128xf32>
    %435 = arith.mulf %434, %358 : vector<1x128xf32>
    %436 = vector.broadcast %432 : f32 to vector<1x128xf32>
    %437 = arith.addf %435, %436 : vector<1x128xf32>
    %438 = math.tanh %437 : vector<1x128xf32>
    %439 = vector.broadcast %433 : f32 to vector<1x128xf32>
    %440 = arith.mulf %439, %438 : vector<1x128xf32>
    %441 = arith.addf %430, %440 : vector<1x128xf32>
    %c58 = arith.constant 58 : index
    %442 = memref.load %arg2[%c58] : memref<152xf32, #tpu.memory_space<smem>>
    %c64 = arith.constant 64 : index
    %443 = memref.load %arg2[%c64] : memref<152xf32, #tpu.memory_space<smem>>
    %c70 = arith.constant 70 : index
    %444 = memref.load %arg2[%c70] : memref<152xf32, #tpu.memory_space<smem>>
    %445 = vector.broadcast %442 : f32 to vector<1x128xf32>
    %446 = arith.mulf %445, %358 : vector<1x128xf32>
    %447 = vector.broadcast %443 : f32 to vector<1x128xf32>
    %448 = arith.addf %446, %447 : vector<1x128xf32>
    %449 = math.tanh %448 : vector<1x128xf32>
    %450 = vector.broadcast %444 : f32 to vector<1x128xf32>
    %451 = arith.mulf %450, %449 : vector<1x128xf32>
    %452 = arith.addf %441, %451 : vector<1x128xf32>
    %c59 = arith.constant 59 : index
    %453 = memref.load %arg2[%c59] : memref<152xf32, #tpu.memory_space<smem>>
    %c65 = arith.constant 65 : index
    %454 = memref.load %arg2[%c65] : memref<152xf32, #tpu.memory_space<smem>>
    %c71 = arith.constant 71 : index
    %455 = memref.load %arg2[%c71] : memref<152xf32, #tpu.memory_space<smem>>
    %456 = vector.broadcast %453 : f32 to vector<1x128xf32>
    %457 = arith.mulf %456, %358 : vector<1x128xf32>
    %458 = vector.broadcast %454 : f32 to vector<1x128xf32>
    %459 = arith.addf %457, %458 : vector<1x128xf32>
    %460 = math.tanh %459 : vector<1x128xf32>
    %461 = vector.broadcast %455 : f32 to vector<1x128xf32>
    %462 = arith.mulf %461, %460 : vector<1x128xf32>
    %463 = arith.addf %452, %462 : vector<1x128xf32>
    %c60 = arith.constant 60 : index
    %464 = memref.load %arg2[%c60] : memref<152xf32, #tpu.memory_space<smem>>
    %c66 = arith.constant 66 : index
    %465 = memref.load %arg2[%c66] : memref<152xf32, #tpu.memory_space<smem>>
    %c72 = arith.constant 72 : index
    %466 = memref.load %arg2[%c72] : memref<152xf32, #tpu.memory_space<smem>>
    %467 = vector.broadcast %464 : f32 to vector<1x128xf32>
    %468 = arith.mulf %467, %358 : vector<1x128xf32>
    %469 = vector.broadcast %465 : f32 to vector<1x128xf32>
    %470 = arith.addf %468, %469 : vector<1x128xf32>
    %471 = math.tanh %470 : vector<1x128xf32>
    %472 = vector.broadcast %466 : f32 to vector<1x128xf32>
    %473 = arith.mulf %472, %471 : vector<1x128xf32>
    %474 = arith.addf %463, %473 : vector<1x128xf32>
    %c61 = arith.constant 61 : index
    %475 = memref.load %arg2[%c61] : memref<152xf32, #tpu.memory_space<smem>>
    %c67 = arith.constant 67 : index
    %476 = memref.load %arg2[%c67] : memref<152xf32, #tpu.memory_space<smem>>
    %c73 = arith.constant 73 : index
    %477 = memref.load %arg2[%c73] : memref<152xf32, #tpu.memory_space<smem>>
    %478 = vector.broadcast %475 : f32 to vector<1x128xf32>
    %479 = arith.mulf %478, %358 : vector<1x128xf32>
    %480 = vector.broadcast %476 : f32 to vector<1x128xf32>
    %481 = arith.addf %479, %480 : vector<1x128xf32>
    %482 = math.tanh %481 : vector<1x128xf32>
    %483 = vector.broadcast %477 : f32 to vector<1x128xf32>
    %484 = arith.mulf %483, %482 : vector<1x128xf32>
    %485 = arith.addf %474, %484 : vector<1x128xf32>
    %c62 = arith.constant 62 : index
    %486 = memref.load %arg2[%c62] : memref<152xf32, #tpu.memory_space<smem>>
    %c68 = arith.constant 68 : index
    %487 = memref.load %arg2[%c68] : memref<152xf32, #tpu.memory_space<smem>>
    %c74 = arith.constant 74 : index
    %488 = memref.load %arg2[%c74] : memref<152xf32, #tpu.memory_space<smem>>
    %489 = vector.broadcast %486 : f32 to vector<1x128xf32>
    %490 = arith.mulf %489, %358 : vector<1x128xf32>
    %491 = vector.broadcast %487 : f32 to vector<1x128xf32>
    %492 = arith.addf %490, %491 : vector<1x128xf32>
    %493 = math.tanh %492 : vector<1x128xf32>
    %494 = vector.broadcast %488 : f32 to vector<1x128xf32>
    %495 = arith.mulf %494, %493 : vector<1x128xf32>
    %496 = arith.addf %485, %495 : vector<1x128xf32>
    %c75 = arith.constant 75 : index
    %497 = memref.load %arg2[%c75] : memref<152xf32, #tpu.memory_space<smem>>
    %498 = vector.broadcast %497 : f32 to vector<1x128xf32>
    %499 = arith.addf %496, %498 : vector<1x128xf32>
    %500 = arith.subf %429, %499 : vector<1x128xf32>
    %cst_50 = arith.constant 0.000000e+00 : f32
    %501 = vector.broadcast %cst_50 : f32 to vector<1x128xf32>
    %c114 = arith.constant 114 : index
    %502 = memref.load %arg2[%c114] : memref<152xf32, #tpu.memory_space<smem>>
    %c120 = arith.constant 120 : index
    %503 = memref.load %arg2[%c120] : memref<152xf32, #tpu.memory_space<smem>>
    %c126 = arith.constant 126 : index
    %504 = memref.load %arg2[%c126] : memref<152xf32, #tpu.memory_space<smem>>
    %505 = vector.broadcast %502 : f32 to vector<1x128xf32>
    %506 = arith.mulf %505, %500 : vector<1x128xf32>
    %507 = vector.broadcast %503 : f32 to vector<1x128xf32>
    %508 = arith.addf %506, %507 : vector<1x128xf32>
    %509 = math.tanh %508 : vector<1x128xf32>
    %510 = vector.broadcast %504 : f32 to vector<1x128xf32>
    %511 = arith.mulf %510, %509 : vector<1x128xf32>
    %512 = arith.addf %501, %511 : vector<1x128xf32>
    %c115 = arith.constant 115 : index
    %513 = memref.load %arg2[%c115] : memref<152xf32, #tpu.memory_space<smem>>
    %c121 = arith.constant 121 : index
    %514 = memref.load %arg2[%c121] : memref<152xf32, #tpu.memory_space<smem>>
    %c127 = arith.constant 127 : index
    %515 = memref.load %arg2[%c127] : memref<152xf32, #tpu.memory_space<smem>>
    %516 = vector.broadcast %513 : f32 to vector<1x128xf32>
    %517 = arith.mulf %516, %500 : vector<1x128xf32>
    %518 = vector.broadcast %514 : f32 to vector<1x128xf32>
    %519 = arith.addf %517, %518 : vector<1x128xf32>
    %520 = math.tanh %519 : vector<1x128xf32>
    %521 = vector.broadcast %515 : f32 to vector<1x128xf32>
    %522 = arith.mulf %521, %520 : vector<1x128xf32>
    %523 = arith.addf %512, %522 : vector<1x128xf32>
    %c116 = arith.constant 116 : index
    %524 = memref.load %arg2[%c116] : memref<152xf32, #tpu.memory_space<smem>>
    %c122 = arith.constant 122 : index
    %525 = memref.load %arg2[%c122] : memref<152xf32, #tpu.memory_space<smem>>
    %c128 = arith.constant 128 : index
    %526 = memref.load %arg2[%c128] : memref<152xf32, #tpu.memory_space<smem>>
    %527 = vector.broadcast %524 : f32 to vector<1x128xf32>
    %528 = arith.mulf %527, %500 : vector<1x128xf32>
    %529 = vector.broadcast %525 : f32 to vector<1x128xf32>
    %530 = arith.addf %528, %529 : vector<1x128xf32>
    %531 = math.tanh %530 : vector<1x128xf32>
    %532 = vector.broadcast %526 : f32 to vector<1x128xf32>
    %533 = arith.mulf %532, %531 : vector<1x128xf32>
    %534 = arith.addf %523, %533 : vector<1x128xf32>
    %c117 = arith.constant 117 : index
    %535 = memref.load %arg2[%c117] : memref<152xf32, #tpu.memory_space<smem>>
    %c123 = arith.constant 123 : index
    %536 = memref.load %arg2[%c123] : memref<152xf32, #tpu.memory_space<smem>>
    %c129 = arith.constant 129 : index
    %537 = memref.load %arg2[%c129] : memref<152xf32, #tpu.memory_space<smem>>
    %538 = vector.broadcast %535 : f32 to vector<1x128xf32>
    %539 = arith.mulf %538, %500 : vector<1x128xf32>
    %540 = vector.broadcast %536 : f32 to vector<1x128xf32>
    %541 = arith.addf %539, %540 : vector<1x128xf32>
    %542 = math.tanh %541 : vector<1x128xf32>
    %543 = vector.broadcast %537 : f32 to vector<1x128xf32>
    %544 = arith.mulf %543, %542 : vector<1x128xf32>
    %545 = arith.addf %534, %544 : vector<1x128xf32>
    %c118 = arith.constant 118 : index
    %546 = memref.load %arg2[%c118] : memref<152xf32, #tpu.memory_space<smem>>
    %c124 = arith.constant 124 : index
    %547 = memref.load %arg2[%c124] : memref<152xf32, #tpu.memory_space<smem>>
    %c130 = arith.constant 130 : index
    %548 = memref.load %arg2[%c130] : memref<152xf32, #tpu.memory_space<smem>>
    %549 = vector.broadcast %546 : f32 to vector<1x128xf32>
    %550 = arith.mulf %549, %500 : vector<1x128xf32>
    %551 = vector.broadcast %547 : f32 to vector<1x128xf32>
    %552 = arith.addf %550, %551 : vector<1x128xf32>
    %553 = math.tanh %552 : vector<1x128xf32>
    %554 = vector.broadcast %548 : f32 to vector<1x128xf32>
    %555 = arith.mulf %554, %553 : vector<1x128xf32>
    %556 = arith.addf %545, %555 : vector<1x128xf32>
    %c119 = arith.constant 119 : index
    %557 = memref.load %arg2[%c119] : memref<152xf32, #tpu.memory_space<smem>>
    %c125 = arith.constant 125 : index
    %558 = memref.load %arg2[%c125] : memref<152xf32, #tpu.memory_space<smem>>
    %c131 = arith.constant 131 : index
    %559 = memref.load %arg2[%c131] : memref<152xf32, #tpu.memory_space<smem>>
    %560 = vector.broadcast %557 : f32 to vector<1x128xf32>
    %561 = arith.mulf %560, %500 : vector<1x128xf32>
    %562 = vector.broadcast %558 : f32 to vector<1x128xf32>
    %563 = arith.addf %561, %562 : vector<1x128xf32>
    %564 = math.tanh %563 : vector<1x128xf32>
    %565 = vector.broadcast %559 : f32 to vector<1x128xf32>
    %566 = arith.mulf %565, %564 : vector<1x128xf32>
    %567 = arith.addf %556, %566 : vector<1x128xf32>
    %c132 = arith.constant 132 : index
    %568 = memref.load %arg2[%c132] : memref<152xf32, #tpu.memory_space<smem>>
    %569 = vector.broadcast %568 : f32 to vector<1x128xf32>
    %570 = arith.addf %567, %569 : vector<1x128xf32>
    %571 = arith.addf %358, %570 : vector<1x128xf32>
    %cst_51 = arith.constant 0.000000e+00 : f32
    %572 = vector.broadcast %cst_51 : f32 to vector<1x128xf32>
    %c57_52 = arith.constant 57 : index
    %573 = memref.load %arg2[%c57_52] : memref<152xf32, #tpu.memory_space<smem>>
    %c63_53 = arith.constant 63 : index
    %574 = memref.load %arg2[%c63_53] : memref<152xf32, #tpu.memory_space<smem>>
    %c69_54 = arith.constant 69 : index
    %575 = memref.load %arg2[%c69_54] : memref<152xf32, #tpu.memory_space<smem>>
    %576 = vector.broadcast %573 : f32 to vector<1x128xf32>
    %577 = arith.mulf %576, %571 : vector<1x128xf32>
    %578 = vector.broadcast %574 : f32 to vector<1x128xf32>
    %579 = arith.addf %577, %578 : vector<1x128xf32>
    %580 = math.tanh %579 : vector<1x128xf32>
    %581 = vector.broadcast %575 : f32 to vector<1x128xf32>
    %582 = arith.mulf %581, %580 : vector<1x128xf32>
    %583 = arith.addf %572, %582 : vector<1x128xf32>
    %c58_55 = arith.constant 58 : index
    %584 = memref.load %arg2[%c58_55] : memref<152xf32, #tpu.memory_space<smem>>
    %c64_56 = arith.constant 64 : index
    %585 = memref.load %arg2[%c64_56] : memref<152xf32, #tpu.memory_space<smem>>
    %c70_57 = arith.constant 70 : index
    %586 = memref.load %arg2[%c70_57] : memref<152xf32, #tpu.memory_space<smem>>
    %587 = vector.broadcast %584 : f32 to vector<1x128xf32>
    %588 = arith.mulf %587, %571 : vector<1x128xf32>
    %589 = vector.broadcast %585 : f32 to vector<1x128xf32>
    %590 = arith.addf %588, %589 : vector<1x128xf32>
    %591 = math.tanh %590 : vector<1x128xf32>
    %592 = vector.broadcast %586 : f32 to vector<1x128xf32>
    %593 = arith.mulf %592, %591 : vector<1x128xf32>
    %594 = arith.addf %583, %593 : vector<1x128xf32>
    %c59_58 = arith.constant 59 : index
    %595 = memref.load %arg2[%c59_58] : memref<152xf32, #tpu.memory_space<smem>>
    %c65_59 = arith.constant 65 : index
    %596 = memref.load %arg2[%c65_59] : memref<152xf32, #tpu.memory_space<smem>>
    %c71_60 = arith.constant 71 : index
    %597 = memref.load %arg2[%c71_60] : memref<152xf32, #tpu.memory_space<smem>>
    %598 = vector.broadcast %595 : f32 to vector<1x128xf32>
    %599 = arith.mulf %598, %571 : vector<1x128xf32>
    %600 = vector.broadcast %596 : f32 to vector<1x128xf32>
    %601 = arith.addf %599, %600 : vector<1x128xf32>
    %602 = math.tanh %601 : vector<1x128xf32>
    %603 = vector.broadcast %597 : f32 to vector<1x128xf32>
    %604 = arith.mulf %603, %602 : vector<1x128xf32>
    %605 = arith.addf %594, %604 : vector<1x128xf32>
    %c60_61 = arith.constant 60 : index
    %606 = memref.load %arg2[%c60_61] : memref<152xf32, #tpu.memory_space<smem>>
    %c66_62 = arith.constant 66 : index
    %607 = memref.load %arg2[%c66_62] : memref<152xf32, #tpu.memory_space<smem>>
    %c72_63 = arith.constant 72 : index
    %608 = memref.load %arg2[%c72_63] : memref<152xf32, #tpu.memory_space<smem>>
    %609 = vector.broadcast %606 : f32 to vector<1x128xf32>
    %610 = arith.mulf %609, %571 : vector<1x128xf32>
    %611 = vector.broadcast %607 : f32 to vector<1x128xf32>
    %612 = arith.addf %610, %611 : vector<1x128xf32>
    %613 = math.tanh %612 : vector<1x128xf32>
    %614 = vector.broadcast %608 : f32 to vector<1x128xf32>
    %615 = arith.mulf %614, %613 : vector<1x128xf32>
    %616 = arith.addf %605, %615 : vector<1x128xf32>
    %c61_64 = arith.constant 61 : index
    %617 = memref.load %arg2[%c61_64] : memref<152xf32, #tpu.memory_space<smem>>
    %c67_65 = arith.constant 67 : index
    %618 = memref.load %arg2[%c67_65] : memref<152xf32, #tpu.memory_space<smem>>
    %c73_66 = arith.constant 73 : index
    %619 = memref.load %arg2[%c73_66] : memref<152xf32, #tpu.memory_space<smem>>
    %620 = vector.broadcast %617 : f32 to vector<1x128xf32>
    %621 = arith.mulf %620, %571 : vector<1x128xf32>
    %622 = vector.broadcast %618 : f32 to vector<1x128xf32>
    %623 = arith.addf %621, %622 : vector<1x128xf32>
    %624 = math.tanh %623 : vector<1x128xf32>
    %625 = vector.broadcast %619 : f32 to vector<1x128xf32>
    %626 = arith.mulf %625, %624 : vector<1x128xf32>
    %627 = arith.addf %616, %626 : vector<1x128xf32>
    %c62_67 = arith.constant 62 : index
    %628 = memref.load %arg2[%c62_67] : memref<152xf32, #tpu.memory_space<smem>>
    %c68_68 = arith.constant 68 : index
    %629 = memref.load %arg2[%c68_68] : memref<152xf32, #tpu.memory_space<smem>>
    %c74_69 = arith.constant 74 : index
    %630 = memref.load %arg2[%c74_69] : memref<152xf32, #tpu.memory_space<smem>>
    %631 = vector.broadcast %628 : f32 to vector<1x128xf32>
    %632 = arith.mulf %631, %571 : vector<1x128xf32>
    %633 = vector.broadcast %629 : f32 to vector<1x128xf32>
    %634 = arith.addf %632, %633 : vector<1x128xf32>
    %635 = math.tanh %634 : vector<1x128xf32>
    %636 = vector.broadcast %630 : f32 to vector<1x128xf32>
    %637 = arith.mulf %636, %635 : vector<1x128xf32>
    %638 = arith.addf %627, %637 : vector<1x128xf32>
    %c75_70 = arith.constant 75 : index
    %639 = memref.load %arg2[%c75_70] : memref<152xf32, #tpu.memory_space<smem>>
    %640 = vector.broadcast %639 : f32 to vector<1x128xf32>
    %641 = arith.addf %638, %640 : vector<1x128xf32>
    %642 = arith.subf %500, %641 : vector<1x128xf32>
    %cst_71 = arith.constant 0.000000e+00 : f32
    %643 = vector.broadcast %cst_71 : f32 to vector<1x128xf32>
    %c76 = arith.constant 76 : index
    %644 = memref.load %arg2[%c76] : memref<152xf32, #tpu.memory_space<smem>>
    %c82 = arith.constant 82 : index
    %645 = memref.load %arg2[%c82] : memref<152xf32, #tpu.memory_space<smem>>
    %c88 = arith.constant 88 : index
    %646 = memref.load %arg2[%c88] : memref<152xf32, #tpu.memory_space<smem>>
    %647 = vector.broadcast %644 : f32 to vector<1x128xf32>
    %648 = arith.mulf %647, %571 : vector<1x128xf32>
    %649 = vector.broadcast %645 : f32 to vector<1x128xf32>
    %650 = arith.addf %648, %649 : vector<1x128xf32>
    %651 = math.tanh %650 : vector<1x128xf32>
    %652 = vector.broadcast %646 : f32 to vector<1x128xf32>
    %653 = arith.mulf %652, %651 : vector<1x128xf32>
    %654 = arith.addf %643, %653 : vector<1x128xf32>
    %c77 = arith.constant 77 : index
    %655 = memref.load %arg2[%c77] : memref<152xf32, #tpu.memory_space<smem>>
    %c83 = arith.constant 83 : index
    %656 = memref.load %arg2[%c83] : memref<152xf32, #tpu.memory_space<smem>>
    %c89 = arith.constant 89 : index
    %657 = memref.load %arg2[%c89] : memref<152xf32, #tpu.memory_space<smem>>
    %658 = vector.broadcast %655 : f32 to vector<1x128xf32>
    %659 = arith.mulf %658, %571 : vector<1x128xf32>
    %660 = vector.broadcast %656 : f32 to vector<1x128xf32>
    %661 = arith.addf %659, %660 : vector<1x128xf32>
    %662 = math.tanh %661 : vector<1x128xf32>
    %663 = vector.broadcast %657 : f32 to vector<1x128xf32>
    %664 = arith.mulf %663, %662 : vector<1x128xf32>
    %665 = arith.addf %654, %664 : vector<1x128xf32>
    %c78 = arith.constant 78 : index
    %666 = memref.load %arg2[%c78] : memref<152xf32, #tpu.memory_space<smem>>
    %c84 = arith.constant 84 : index
    %667 = memref.load %arg2[%c84] : memref<152xf32, #tpu.memory_space<smem>>
    %c90 = arith.constant 90 : index
    %668 = memref.load %arg2[%c90] : memref<152xf32, #tpu.memory_space<smem>>
    %669 = vector.broadcast %666 : f32 to vector<1x128xf32>
    %670 = arith.mulf %669, %571 : vector<1x128xf32>
    %671 = vector.broadcast %667 : f32 to vector<1x128xf32>
    %672 = arith.addf %670, %671 : vector<1x128xf32>
    %673 = math.tanh %672 : vector<1x128xf32>
    %674 = vector.broadcast %668 : f32 to vector<1x128xf32>
    %675 = arith.mulf %674, %673 : vector<1x128xf32>
    %676 = arith.addf %665, %675 : vector<1x128xf32>
    %c79 = arith.constant 79 : index
    %677 = memref.load %arg2[%c79] : memref<152xf32, #tpu.memory_space<smem>>
    %c85 = arith.constant 85 : index
    %678 = memref.load %arg2[%c85] : memref<152xf32, #tpu.memory_space<smem>>
    %c91 = arith.constant 91 : index
    %679 = memref.load %arg2[%c91] : memref<152xf32, #tpu.memory_space<smem>>
    %680 = vector.broadcast %677 : f32 to vector<1x128xf32>
    %681 = arith.mulf %680, %571 : vector<1x128xf32>
    %682 = vector.broadcast %678 : f32 to vector<1x128xf32>
    %683 = arith.addf %681, %682 : vector<1x128xf32>
    %684 = math.tanh %683 : vector<1x128xf32>
    %685 = vector.broadcast %679 : f32 to vector<1x128xf32>
    %686 = arith.mulf %685, %684 : vector<1x128xf32>
    %687 = arith.addf %676, %686 : vector<1x128xf32>
    %c80 = arith.constant 80 : index
    %688 = memref.load %arg2[%c80] : memref<152xf32, #tpu.memory_space<smem>>
    %c86 = arith.constant 86 : index
    %689 = memref.load %arg2[%c86] : memref<152xf32, #tpu.memory_space<smem>>
    %c92 = arith.constant 92 : index
    %690 = memref.load %arg2[%c92] : memref<152xf32, #tpu.memory_space<smem>>
    %691 = vector.broadcast %688 : f32 to vector<1x128xf32>
    %692 = arith.mulf %691, %571 : vector<1x128xf32>
    %693 = vector.broadcast %689 : f32 to vector<1x128xf32>
    %694 = arith.addf %692, %693 : vector<1x128xf32>
    %695 = math.tanh %694 : vector<1x128xf32>
    %696 = vector.broadcast %690 : f32 to vector<1x128xf32>
    %697 = arith.mulf %696, %695 : vector<1x128xf32>
    %698 = arith.addf %687, %697 : vector<1x128xf32>
    %c81 = arith.constant 81 : index
    %699 = memref.load %arg2[%c81] : memref<152xf32, #tpu.memory_space<smem>>
    %c87 = arith.constant 87 : index
    %700 = memref.load %arg2[%c87] : memref<152xf32, #tpu.memory_space<smem>>
    %c93 = arith.constant 93 : index
    %701 = memref.load %arg2[%c93] : memref<152xf32, #tpu.memory_space<smem>>
    %702 = vector.broadcast %699 : f32 to vector<1x128xf32>
    %703 = arith.mulf %702, %571 : vector<1x128xf32>
    %704 = vector.broadcast %700 : f32 to vector<1x128xf32>
    %705 = arith.addf %703, %704 : vector<1x128xf32>
    %706 = math.tanh %705 : vector<1x128xf32>
    %707 = vector.broadcast %701 : f32 to vector<1x128xf32>
    %708 = arith.mulf %707, %706 : vector<1x128xf32>
    %709 = arith.addf %698, %708 : vector<1x128xf32>
    %c94 = arith.constant 94 : index
    %710 = memref.load %arg2[%c94] : memref<152xf32, #tpu.memory_space<smem>>
    %711 = vector.broadcast %710 : f32 to vector<1x128xf32>
    %712 = arith.addf %709, %711 : vector<1x128xf32>
    %713 = arith.subf %642, %712 : vector<1x128xf32>
    %cst_72 = arith.constant 0.000000e+00 : f32
    %714 = vector.broadcast %cst_72 : f32 to vector<1x128xf32>
    %c133 = arith.constant 133 : index
    %715 = memref.load %arg2[%c133] : memref<152xf32, #tpu.memory_space<smem>>
    %c139 = arith.constant 139 : index
    %716 = memref.load %arg2[%c139] : memref<152xf32, #tpu.memory_space<smem>>
    %c145 = arith.constant 145 : index
    %717 = memref.load %arg2[%c145] : memref<152xf32, #tpu.memory_space<smem>>
    %718 = vector.broadcast %715 : f32 to vector<1x128xf32>
    %719 = arith.mulf %718, %713 : vector<1x128xf32>
    %720 = vector.broadcast %716 : f32 to vector<1x128xf32>
    %721 = arith.addf %719, %720 : vector<1x128xf32>
    %722 = math.tanh %721 : vector<1x128xf32>
    %723 = vector.broadcast %717 : f32 to vector<1x128xf32>
    %724 = arith.mulf %723, %722 : vector<1x128xf32>
    %725 = arith.addf %714, %724 : vector<1x128xf32>
    %c134 = arith.constant 134 : index
    %726 = memref.load %arg2[%c134] : memref<152xf32, #tpu.memory_space<smem>>
    %c140 = arith.constant 140 : index
    %727 = memref.load %arg2[%c140] : memref<152xf32, #tpu.memory_space<smem>>
    %c146 = arith.constant 146 : index
    %728 = memref.load %arg2[%c146] : memref<152xf32, #tpu.memory_space<smem>>
    %729 = vector.broadcast %726 : f32 to vector<1x128xf32>
    %730 = arith.mulf %729, %713 : vector<1x128xf32>
    %731 = vector.broadcast %727 : f32 to vector<1x128xf32>
    %732 = arith.addf %730, %731 : vector<1x128xf32>
    %733 = math.tanh %732 : vector<1x128xf32>
    %734 = vector.broadcast %728 : f32 to vector<1x128xf32>
    %735 = arith.mulf %734, %733 : vector<1x128xf32>
    %736 = arith.addf %725, %735 : vector<1x128xf32>
    %c135 = arith.constant 135 : index
    %737 = memref.load %arg2[%c135] : memref<152xf32, #tpu.memory_space<smem>>
    %c141 = arith.constant 141 : index
    %738 = memref.load %arg2[%c141] : memref<152xf32, #tpu.memory_space<smem>>
    %c147 = arith.constant 147 : index
    %739 = memref.load %arg2[%c147] : memref<152xf32, #tpu.memory_space<smem>>
    %740 = vector.broadcast %737 : f32 to vector<1x128xf32>
    %741 = arith.mulf %740, %713 : vector<1x128xf32>
    %742 = vector.broadcast %738 : f32 to vector<1x128xf32>
    %743 = arith.addf %741, %742 : vector<1x128xf32>
    %744 = math.tanh %743 : vector<1x128xf32>
    %745 = vector.broadcast %739 : f32 to vector<1x128xf32>
    %746 = arith.mulf %745, %744 : vector<1x128xf32>
    %747 = arith.addf %736, %746 : vector<1x128xf32>
    %c136 = arith.constant 136 : index
    %748 = memref.load %arg2[%c136] : memref<152xf32, #tpu.memory_space<smem>>
    %c142 = arith.constant 142 : index
    %749 = memref.load %arg2[%c142] : memref<152xf32, #tpu.memory_space<smem>>
    %c148 = arith.constant 148 : index
    %750 = memref.load %arg2[%c148] : memref<152xf32, #tpu.memory_space<smem>>
    %751 = vector.broadcast %748 : f32 to vector<1x128xf32>
    %752 = arith.mulf %751, %713 : vector<1x128xf32>
    %753 = vector.broadcast %749 : f32 to vector<1x128xf32>
    %754 = arith.addf %752, %753 : vector<1x128xf32>
    %755 = math.tanh %754 : vector<1x128xf32>
    %756 = vector.broadcast %750 : f32 to vector<1x128xf32>
    %757 = arith.mulf %756, %755 : vector<1x128xf32>
    %758 = arith.addf %747, %757 : vector<1x128xf32>
    %c137 = arith.constant 137 : index
    %759 = memref.load %arg2[%c137] : memref<152xf32, #tpu.memory_space<smem>>
    %c143 = arith.constant 143 : index
    %760 = memref.load %arg2[%c143] : memref<152xf32, #tpu.memory_space<smem>>
    %c149 = arith.constant 149 : index
    %761 = memref.load %arg2[%c149] : memref<152xf32, #tpu.memory_space<smem>>
    %762 = vector.broadcast %759 : f32 to vector<1x128xf32>
    %763 = arith.mulf %762, %713 : vector<1x128xf32>
    %764 = vector.broadcast %760 : f32 to vector<1x128xf32>
    %765 = arith.addf %763, %764 : vector<1x128xf32>
    %766 = math.tanh %765 : vector<1x128xf32>
    %767 = vector.broadcast %761 : f32 to vector<1x128xf32>
    %768 = arith.mulf %767, %766 : vector<1x128xf32>
    %769 = arith.addf %758, %768 : vector<1x128xf32>
    %c138 = arith.constant 138 : index
    %770 = memref.load %arg2[%c138] : memref<152xf32, #tpu.memory_space<smem>>
    %c144 = arith.constant 144 : index
    %771 = memref.load %arg2[%c144] : memref<152xf32, #tpu.memory_space<smem>>
    %c150 = arith.constant 150 : index
    %772 = memref.load %arg2[%c150] : memref<152xf32, #tpu.memory_space<smem>>
    %773 = vector.broadcast %770 : f32 to vector<1x128xf32>
    %774 = arith.mulf %773, %713 : vector<1x128xf32>
    %775 = vector.broadcast %771 : f32 to vector<1x128xf32>
    %776 = arith.addf %774, %775 : vector<1x128xf32>
    %777 = math.tanh %776 : vector<1x128xf32>
    %778 = vector.broadcast %772 : f32 to vector<1x128xf32>
    %779 = arith.mulf %778, %777 : vector<1x128xf32>
    %780 = arith.addf %769, %779 : vector<1x128xf32>
    %c151 = arith.constant 151 : index
    %781 = memref.load %arg2[%c151] : memref<152xf32, #tpu.memory_space<smem>>
    %782 = vector.broadcast %781 : f32 to vector<1x128xf32>
    %783 = arith.addf %780, %782 : vector<1x128xf32>
    %784 = arith.addf %571, %783 : vector<1x128xf32>
    %cst_73 = arith.constant 0.000000e+00 : f32
    %785 = vector.broadcast %cst_73 : f32 to vector<1x128xf32>
    %c76_74 = arith.constant 76 : index
    %786 = memref.load %arg2[%c76_74] : memref<152xf32, #tpu.memory_space<smem>>
    %c82_75 = arith.constant 82 : index
    %787 = memref.load %arg2[%c82_75] : memref<152xf32, #tpu.memory_space<smem>>
    %c88_76 = arith.constant 88 : index
    %788 = memref.load %arg2[%c88_76] : memref<152xf32, #tpu.memory_space<smem>>
    %789 = vector.broadcast %786 : f32 to vector<1x128xf32>
    %790 = arith.mulf %789, %784 : vector<1x128xf32>
    %791 = vector.broadcast %787 : f32 to vector<1x128xf32>
    %792 = arith.addf %790, %791 : vector<1x128xf32>
    %793 = math.tanh %792 : vector<1x128xf32>
    %794 = vector.broadcast %788 : f32 to vector<1x128xf32>
    %795 = arith.mulf %794, %793 : vector<1x128xf32>
    %796 = arith.addf %785, %795 : vector<1x128xf32>
    %c77_77 = arith.constant 77 : index
    %797 = memref.load %arg2[%c77_77] : memref<152xf32, #tpu.memory_space<smem>>
    %c83_78 = arith.constant 83 : index
    %798 = memref.load %arg2[%c83_78] : memref<152xf32, #tpu.memory_space<smem>>
    %c89_79 = arith.constant 89 : index
    %799 = memref.load %arg2[%c89_79] : memref<152xf32, #tpu.memory_space<smem>>
    %800 = vector.broadcast %797 : f32 to vector<1x128xf32>
    %801 = arith.mulf %800, %784 : vector<1x128xf32>
    %802 = vector.broadcast %798 : f32 to vector<1x128xf32>
    %803 = arith.addf %801, %802 : vector<1x128xf32>
    %804 = math.tanh %803 : vector<1x128xf32>
    %805 = vector.broadcast %799 : f32 to vector<1x128xf32>
    %806 = arith.mulf %805, %804 : vector<1x128xf32>
    %807 = arith.addf %796, %806 : vector<1x128xf32>
    %c78_80 = arith.constant 78 : index
    %808 = memref.load %arg2[%c78_80] : memref<152xf32, #tpu.memory_space<smem>>
    %c84_81 = arith.constant 84 : index
    %809 = memref.load %arg2[%c84_81] : memref<152xf32, #tpu.memory_space<smem>>
    %c90_82 = arith.constant 90 : index
    %810 = memref.load %arg2[%c90_82] : memref<152xf32, #tpu.memory_space<smem>>
    %811 = vector.broadcast %808 : f32 to vector<1x128xf32>
    %812 = arith.mulf %811, %784 : vector<1x128xf32>
    %813 = vector.broadcast %809 : f32 to vector<1x128xf32>
    %814 = arith.addf %812, %813 : vector<1x128xf32>
    %815 = math.tanh %814 : vector<1x128xf32>
    %816 = vector.broadcast %810 : f32 to vector<1x128xf32>
    %817 = arith.mulf %816, %815 : vector<1x128xf32>
    %818 = arith.addf %807, %817 : vector<1x128xf32>
    %c79_83 = arith.constant 79 : index
    %819 = memref.load %arg2[%c79_83] : memref<152xf32, #tpu.memory_space<smem>>
    %c85_84 = arith.constant 85 : index
    %820 = memref.load %arg2[%c85_84] : memref<152xf32, #tpu.memory_space<smem>>
    %c91_85 = arith.constant 91 : index
    %821 = memref.load %arg2[%c91_85] : memref<152xf32, #tpu.memory_space<smem>>
    %822 = vector.broadcast %819 : f32 to vector<1x128xf32>
    %823 = arith.mulf %822, %784 : vector<1x128xf32>
    %824 = vector.broadcast %820 : f32 to vector<1x128xf32>
    %825 = arith.addf %823, %824 : vector<1x128xf32>
    %826 = math.tanh %825 : vector<1x128xf32>
    %827 = vector.broadcast %821 : f32 to vector<1x128xf32>
    %828 = arith.mulf %827, %826 : vector<1x128xf32>
    %829 = arith.addf %818, %828 : vector<1x128xf32>
    %c80_86 = arith.constant 80 : index
    %830 = memref.load %arg2[%c80_86] : memref<152xf32, #tpu.memory_space<smem>>
    %c86_87 = arith.constant 86 : index
    %831 = memref.load %arg2[%c86_87] : memref<152xf32, #tpu.memory_space<smem>>
    %c92_88 = arith.constant 92 : index
    %832 = memref.load %arg2[%c92_88] : memref<152xf32, #tpu.memory_space<smem>>
    %833 = vector.broadcast %830 : f32 to vector<1x128xf32>
    %834 = arith.mulf %833, %784 : vector<1x128xf32>
    %835 = vector.broadcast %831 : f32 to vector<1x128xf32>
    %836 = arith.addf %834, %835 : vector<1x128xf32>
    %837 = math.tanh %836 : vector<1x128xf32>
    %838 = vector.broadcast %832 : f32 to vector<1x128xf32>
    %839 = arith.mulf %838, %837 : vector<1x128xf32>
    %840 = arith.addf %829, %839 : vector<1x128xf32>
    %c81_89 = arith.constant 81 : index
    %841 = memref.load %arg2[%c81_89] : memref<152xf32, #tpu.memory_space<smem>>
    %c87_90 = arith.constant 87 : index
    %842 = memref.load %arg2[%c87_90] : memref<152xf32, #tpu.memory_space<smem>>
    %c93_91 = arith.constant 93 : index
    %843 = memref.load %arg2[%c93_91] : memref<152xf32, #tpu.memory_space<smem>>
    %844 = vector.broadcast %841 : f32 to vector<1x128xf32>
    %845 = arith.mulf %844, %784 : vector<1x128xf32>
    %846 = vector.broadcast %842 : f32 to vector<1x128xf32>
    %847 = arith.addf %845, %846 : vector<1x128xf32>
    %848 = math.tanh %847 : vector<1x128xf32>
    %849 = vector.broadcast %843 : f32 to vector<1x128xf32>
    %850 = arith.mulf %849, %848 : vector<1x128xf32>
    %851 = arith.addf %840, %850 : vector<1x128xf32>
    %c94_92 = arith.constant 94 : index
    %852 = memref.load %arg2[%c94_92] : memref<152xf32, #tpu.memory_space<smem>>
    %853 = vector.broadcast %852 : f32 to vector<1x128xf32>
    %854 = arith.addf %851, %853 : vector<1x128xf32>
    %855 = arith.subf %713, %854 : vector<1x128xf32>
    %cst_93 = arith.constant 0.000000e+00 : f32
    %856 = vector.broadcast %cst_93 : f32 to vector<1x128xf32>
    %c0_94 = arith.constant 0 : index
    %857 = memref.load %arg2[%c0_94] : memref<152xf32, #tpu.memory_space<smem>>
    %c6_95 = arith.constant 6 : index
    %858 = memref.load %arg2[%c6_95] : memref<152xf32, #tpu.memory_space<smem>>
    %c12_96 = arith.constant 12 : index
    %859 = memref.load %arg2[%c12_96] : memref<152xf32, #tpu.memory_space<smem>>
    %860 = vector.broadcast %857 : f32 to vector<1x128xf32>
    %861 = arith.mulf %860, %784 : vector<1x128xf32>
    %862 = vector.broadcast %858 : f32 to vector<1x128xf32>
    %863 = arith.addf %861, %862 : vector<1x128xf32>
    %864 = math.tanh %863 : vector<1x128xf32>
    %865 = vector.broadcast %859 : f32 to vector<1x128xf32>
    %866 = arith.mulf %865, %864 : vector<1x128xf32>
    %867 = arith.addf %856, %866 : vector<1x128xf32>
    %c1_97 = arith.constant 1 : index
    %868 = memref.load %arg2[%c1_97] : memref<152xf32, #tpu.memory_space<smem>>
    %c7_98 = arith.constant 7 : index
    %869 = memref.load %arg2[%c7_98] : memref<152xf32, #tpu.memory_space<smem>>
    %c13_99 = arith.constant 13 : index
    %870 = memref.load %arg2[%c13_99] : memref<152xf32, #tpu.memory_space<smem>>
    %871 = vector.broadcast %868 : f32 to vector<1x128xf32>
    %872 = arith.mulf %871, %784 : vector<1x128xf32>
    %873 = vector.broadcast %869 : f32 to vector<1x128xf32>
    %874 = arith.addf %872, %873 : vector<1x128xf32>
    %875 = math.tanh %874 : vector<1x128xf32>
    %876 = vector.broadcast %870 : f32 to vector<1x128xf32>
    %877 = arith.mulf %876, %875 : vector<1x128xf32>
    %878 = arith.addf %867, %877 : vector<1x128xf32>
    %c2_100 = arith.constant 2 : index
    %879 = memref.load %arg2[%c2_100] : memref<152xf32, #tpu.memory_space<smem>>
    %c8_101 = arith.constant 8 : index
    %880 = memref.load %arg2[%c8_101] : memref<152xf32, #tpu.memory_space<smem>>
    %c14_102 = arith.constant 14 : index
    %881 = memref.load %arg2[%c14_102] : memref<152xf32, #tpu.memory_space<smem>>
    %882 = vector.broadcast %879 : f32 to vector<1x128xf32>
    %883 = arith.mulf %882, %784 : vector<1x128xf32>
    %884 = vector.broadcast %880 : f32 to vector<1x128xf32>
    %885 = arith.addf %883, %884 : vector<1x128xf32>
    %886 = math.tanh %885 : vector<1x128xf32>
    %887 = vector.broadcast %881 : f32 to vector<1x128xf32>
    %888 = arith.mulf %887, %886 : vector<1x128xf32>
    %889 = arith.addf %878, %888 : vector<1x128xf32>
    %c3_103 = arith.constant 3 : index
    %890 = memref.load %arg2[%c3_103] : memref<152xf32, #tpu.memory_space<smem>>
    %c9_104 = arith.constant 9 : index
    %891 = memref.load %arg2[%c9_104] : memref<152xf32, #tpu.memory_space<smem>>
    %c15_105 = arith.constant 15 : index
    %892 = memref.load %arg2[%c15_105] : memref<152xf32, #tpu.memory_space<smem>>
    %893 = vector.broadcast %890 : f32 to vector<1x128xf32>
    %894 = arith.mulf %893, %784 : vector<1x128xf32>
    %895 = vector.broadcast %891 : f32 to vector<1x128xf32>
    %896 = arith.addf %894, %895 : vector<1x128xf32>
    %897 = math.tanh %896 : vector<1x128xf32>
    %898 = vector.broadcast %892 : f32 to vector<1x128xf32>
    %899 = arith.mulf %898, %897 : vector<1x128xf32>
    %900 = arith.addf %889, %899 : vector<1x128xf32>
    %c4_106 = arith.constant 4 : index
    %901 = memref.load %arg2[%c4_106] : memref<152xf32, #tpu.memory_space<smem>>
    %c10_107 = arith.constant 10 : index
    %902 = memref.load %arg2[%c10_107] : memref<152xf32, #tpu.memory_space<smem>>
    %c16_108 = arith.constant 16 : index
    %903 = memref.load %arg2[%c16_108] : memref<152xf32, #tpu.memory_space<smem>>
    %904 = vector.broadcast %901 : f32 to vector<1x128xf32>
    %905 = arith.mulf %904, %784 : vector<1x128xf32>
    %906 = vector.broadcast %902 : f32 to vector<1x128xf32>
    %907 = arith.addf %905, %906 : vector<1x128xf32>
    %908 = math.tanh %907 : vector<1x128xf32>
    %909 = vector.broadcast %903 : f32 to vector<1x128xf32>
    %910 = arith.mulf %909, %908 : vector<1x128xf32>
    %911 = arith.addf %900, %910 : vector<1x128xf32>
    %c5_109 = arith.constant 5 : index
    %912 = memref.load %arg2[%c5_109] : memref<152xf32, #tpu.memory_space<smem>>
    %c11_110 = arith.constant 11 : index
    %913 = memref.load %arg2[%c11_110] : memref<152xf32, #tpu.memory_space<smem>>
    %c17_111 = arith.constant 17 : index
    %914 = memref.load %arg2[%c17_111] : memref<152xf32, #tpu.memory_space<smem>>
    %915 = vector.broadcast %912 : f32 to vector<1x128xf32>
    %916 = arith.mulf %915, %784 : vector<1x128xf32>
    %917 = vector.broadcast %913 : f32 to vector<1x128xf32>
    %918 = arith.addf %916, %917 : vector<1x128xf32>
    %919 = math.tanh %918 : vector<1x128xf32>
    %920 = vector.broadcast %914 : f32 to vector<1x128xf32>
    %921 = arith.mulf %920, %919 : vector<1x128xf32>
    %922 = arith.addf %911, %921 : vector<1x128xf32>
    %c18_112 = arith.constant 18 : index
    %923 = memref.load %arg2[%c18_112] : memref<152xf32, #tpu.memory_space<smem>>
    %924 = vector.broadcast %923 : f32 to vector<1x128xf32>
    %925 = arith.addf %922, %924 : vector<1x128xf32>
    %926 = arith.addf %855, %925 : vector<1x128xf32>
    %cst_113 = arith.constant 0.000000e+00 : f32
    %927 = vector.broadcast %cst_113 : f32 to vector<1x128xf32>
    %c19_114 = arith.constant 19 : index
    %928 = memref.load %arg2[%c19_114] : memref<152xf32, #tpu.memory_space<smem>>
    %c25_115 = arith.constant 25 : index
    %929 = memref.load %arg2[%c25_115] : memref<152xf32, #tpu.memory_space<smem>>
    %c31_116 = arith.constant 31 : index
    %930 = memref.load %arg2[%c31_116] : memref<152xf32, #tpu.memory_space<smem>>
    %931 = vector.broadcast %928 : f32 to vector<1x128xf32>
    %932 = arith.mulf %931, %926 : vector<1x128xf32>
    %933 = vector.broadcast %929 : f32 to vector<1x128xf32>
    %934 = arith.addf %932, %933 : vector<1x128xf32>
    %935 = math.tanh %934 : vector<1x128xf32>
    %936 = vector.broadcast %930 : f32 to vector<1x128xf32>
    %937 = arith.mulf %936, %935 : vector<1x128xf32>
    %938 = arith.addf %927, %937 : vector<1x128xf32>
    %c20_117 = arith.constant 20 : index
    %939 = memref.load %arg2[%c20_117] : memref<152xf32, #tpu.memory_space<smem>>
    %c26_118 = arith.constant 26 : index
    %940 = memref.load %arg2[%c26_118] : memref<152xf32, #tpu.memory_space<smem>>
    %c32_119 = arith.constant 32 : index
    %941 = memref.load %arg2[%c32_119] : memref<152xf32, #tpu.memory_space<smem>>
    %942 = vector.broadcast %939 : f32 to vector<1x128xf32>
    %943 = arith.mulf %942, %926 : vector<1x128xf32>
    %944 = vector.broadcast %940 : f32 to vector<1x128xf32>
    %945 = arith.addf %943, %944 : vector<1x128xf32>
    %946 = math.tanh %945 : vector<1x128xf32>
    %947 = vector.broadcast %941 : f32 to vector<1x128xf32>
    %948 = arith.mulf %947, %946 : vector<1x128xf32>
    %949 = arith.addf %938, %948 : vector<1x128xf32>
    %c21_120 = arith.constant 21 : index
    %950 = memref.load %arg2[%c21_120] : memref<152xf32, #tpu.memory_space<smem>>
    %c27_121 = arith.constant 27 : index
    %951 = memref.load %arg2[%c27_121] : memref<152xf32, #tpu.memory_space<smem>>
    %c33_122 = arith.constant 33 : index
    %952 = memref.load %arg2[%c33_122] : memref<152xf32, #tpu.memory_space<smem>>
    %953 = vector.broadcast %950 : f32 to vector<1x128xf32>
    %954 = arith.mulf %953, %926 : vector<1x128xf32>
    %955 = vector.broadcast %951 : f32 to vector<1x128xf32>
    %956 = arith.addf %954, %955 : vector<1x128xf32>
    %957 = math.tanh %956 : vector<1x128xf32>
    %958 = vector.broadcast %952 : f32 to vector<1x128xf32>
    %959 = arith.mulf %958, %957 : vector<1x128xf32>
    %960 = arith.addf %949, %959 : vector<1x128xf32>
    %c22_123 = arith.constant 22 : index
    %961 = memref.load %arg2[%c22_123] : memref<152xf32, #tpu.memory_space<smem>>
    %c28_124 = arith.constant 28 : index
    %962 = memref.load %arg2[%c28_124] : memref<152xf32, #tpu.memory_space<smem>>
    %c34_125 = arith.constant 34 : index
    %963 = memref.load %arg2[%c34_125] : memref<152xf32, #tpu.memory_space<smem>>
    %964 = vector.broadcast %961 : f32 to vector<1x128xf32>
    %965 = arith.mulf %964, %926 : vector<1x128xf32>
    %966 = vector.broadcast %962 : f32 to vector<1x128xf32>
    %967 = arith.addf %965, %966 : vector<1x128xf32>
    %968 = math.tanh %967 : vector<1x128xf32>
    %969 = vector.broadcast %963 : f32 to vector<1x128xf32>
    %970 = arith.mulf %969, %968 : vector<1x128xf32>
    %971 = arith.addf %960, %970 : vector<1x128xf32>
    %c23_126 = arith.constant 23 : index
    %972 = memref.load %arg2[%c23_126] : memref<152xf32, #tpu.memory_space<smem>>
    %c29_127 = arith.constant 29 : index
    %973 = memref.load %arg2[%c29_127] : memref<152xf32, #tpu.memory_space<smem>>
    %c35_128 = arith.constant 35 : index
    %974 = memref.load %arg2[%c35_128] : memref<152xf32, #tpu.memory_space<smem>>
    %975 = vector.broadcast %972 : f32 to vector<1x128xf32>
    %976 = arith.mulf %975, %926 : vector<1x128xf32>
    %977 = vector.broadcast %973 : f32 to vector<1x128xf32>
    %978 = arith.addf %976, %977 : vector<1x128xf32>
    %979 = math.tanh %978 : vector<1x128xf32>
    %980 = vector.broadcast %974 : f32 to vector<1x128xf32>
    %981 = arith.mulf %980, %979 : vector<1x128xf32>
    %982 = arith.addf %971, %981 : vector<1x128xf32>
    %c24_129 = arith.constant 24 : index
    %983 = memref.load %arg2[%c24_129] : memref<152xf32, #tpu.memory_space<smem>>
    %c30_130 = arith.constant 30 : index
    %984 = memref.load %arg2[%c30_130] : memref<152xf32, #tpu.memory_space<smem>>
    %c36_131 = arith.constant 36 : index
    %985 = memref.load %arg2[%c36_131] : memref<152xf32, #tpu.memory_space<smem>>
    %986 = vector.broadcast %983 : f32 to vector<1x128xf32>
    %987 = arith.mulf %986, %926 : vector<1x128xf32>
    %988 = vector.broadcast %984 : f32 to vector<1x128xf32>
    %989 = arith.addf %987, %988 : vector<1x128xf32>
    %990 = math.tanh %989 : vector<1x128xf32>
    %991 = vector.broadcast %985 : f32 to vector<1x128xf32>
    %992 = arith.mulf %991, %990 : vector<1x128xf32>
    %993 = arith.addf %982, %992 : vector<1x128xf32>
    %c37_132 = arith.constant 37 : index
    %994 = memref.load %arg2[%c37_132] : memref<152xf32, #tpu.memory_space<smem>>
    %995 = vector.broadcast %994 : f32 to vector<1x128xf32>
    %996 = arith.addf %993, %995 : vector<1x128xf32>
    %997 = arith.subf %784, %996 : vector<1x128xf32>
    %cst_133 = arith.constant 0.000000e+00 : f32
    %998 = vector.broadcast %cst_133 : f32 to vector<1x128xf32>
    %c0_134 = arith.constant 0 : index
    %999 = memref.load %arg2[%c0_134] : memref<152xf32, #tpu.memory_space<smem>>
    %c6_135 = arith.constant 6 : index
    %1000 = memref.load %arg2[%c6_135] : memref<152xf32, #tpu.memory_space<smem>>
    %c12_136 = arith.constant 12 : index
    %1001 = memref.load %arg2[%c12_136] : memref<152xf32, #tpu.memory_space<smem>>
    %1002 = vector.broadcast %999 : f32 to vector<1x128xf32>
    %1003 = arith.mulf %1002, %997 : vector<1x128xf32>
    %1004 = vector.broadcast %1000 : f32 to vector<1x128xf32>
    %1005 = arith.addf %1003, %1004 : vector<1x128xf32>
    %1006 = math.tanh %1005 : vector<1x128xf32>
    %1007 = vector.broadcast %1001 : f32 to vector<1x128xf32>
    %1008 = arith.mulf %1007, %1006 : vector<1x128xf32>
    %1009 = arith.addf %998, %1008 : vector<1x128xf32>
    %c1_137 = arith.constant 1 : index
    %1010 = memref.load %arg2[%c1_137] : memref<152xf32, #tpu.memory_space<smem>>
    %c7_138 = arith.constant 7 : index
    %1011 = memref.load %arg2[%c7_138] : memref<152xf32, #tpu.memory_space<smem>>
    %c13_139 = arith.constant 13 : index
    %1012 = memref.load %arg2[%c13_139] : memref<152xf32, #tpu.memory_space<smem>>
    %1013 = vector.broadcast %1010 : f32 to vector<1x128xf32>
    %1014 = arith.mulf %1013, %997 : vector<1x128xf32>
    %1015 = vector.broadcast %1011 : f32 to vector<1x128xf32>
    %1016 = arith.addf %1014, %1015 : vector<1x128xf32>
    %1017 = math.tanh %1016 : vector<1x128xf32>
    %1018 = vector.broadcast %1012 : f32 to vector<1x128xf32>
    %1019 = arith.mulf %1018, %1017 : vector<1x128xf32>
    %1020 = arith.addf %1009, %1019 : vector<1x128xf32>
    %c2_140 = arith.constant 2 : index
    %1021 = memref.load %arg2[%c2_140] : memref<152xf32, #tpu.memory_space<smem>>
    %c8_141 = arith.constant 8 : index
    %1022 = memref.load %arg2[%c8_141] : memref<152xf32, #tpu.memory_space<smem>>
    %c14_142 = arith.constant 14 : index
    %1023 = memref.load %arg2[%c14_142] : memref<152xf32, #tpu.memory_space<smem>>
    %1024 = vector.broadcast %1021 : f32 to vector<1x128xf32>
    %1025 = arith.mulf %1024, %997 : vector<1x128xf32>
    %1026 = vector.broadcast %1022 : f32 to vector<1x128xf32>
    %1027 = arith.addf %1025, %1026 : vector<1x128xf32>
    %1028 = math.tanh %1027 : vector<1x128xf32>
    %1029 = vector.broadcast %1023 : f32 to vector<1x128xf32>
    %1030 = arith.mulf %1029, %1028 : vector<1x128xf32>
    %1031 = arith.addf %1020, %1030 : vector<1x128xf32>
    %c3_143 = arith.constant 3 : index
    %1032 = memref.load %arg2[%c3_143] : memref<152xf32, #tpu.memory_space<smem>>
    %c9_144 = arith.constant 9 : index
    %1033 = memref.load %arg2[%c9_144] : memref<152xf32, #tpu.memory_space<smem>>
    %c15_145 = arith.constant 15 : index
    %1034 = memref.load %arg2[%c15_145] : memref<152xf32, #tpu.memory_space<smem>>
    %1035 = vector.broadcast %1032 : f32 to vector<1x128xf32>
    %1036 = arith.mulf %1035, %997 : vector<1x128xf32>
    %1037 = vector.broadcast %1033 : f32 to vector<1x128xf32>
    %1038 = arith.addf %1036, %1037 : vector<1x128xf32>
    %1039 = math.tanh %1038 : vector<1x128xf32>
    %1040 = vector.broadcast %1034 : f32 to vector<1x128xf32>
    %1041 = arith.mulf %1040, %1039 : vector<1x128xf32>
    %1042 = arith.addf %1031, %1041 : vector<1x128xf32>
    %c4_146 = arith.constant 4 : index
    %1043 = memref.load %arg2[%c4_146] : memref<152xf32, #tpu.memory_space<smem>>
    %c10_147 = arith.constant 10 : index
    %1044 = memref.load %arg2[%c10_147] : memref<152xf32, #tpu.memory_space<smem>>
    %c16_148 = arith.constant 16 : index
    %1045 = memref.load %arg2[%c16_148] : memref<152xf32, #tpu.memory_space<smem>>
    %1046 = vector.broadcast %1043 : f32 to vector<1x128xf32>
    %1047 = arith.mulf %1046, %997 : vector<1x128xf32>
    %1048 = vector.broadcast %1044 : f32 to vector<1x128xf32>
    %1049 = arith.addf %1047, %1048 : vector<1x128xf32>
    %1050 = math.tanh %1049 : vector<1x128xf32>
    %1051 = vector.broadcast %1045 : f32 to vector<1x128xf32>
    %1052 = arith.mulf %1051, %1050 : vector<1x128xf32>
    %1053 = arith.addf %1042, %1052 : vector<1x128xf32>
    %c5_149 = arith.constant 5 : index
    %1054 = memref.load %arg2[%c5_149] : memref<152xf32, #tpu.memory_space<smem>>
    %c11_150 = arith.constant 11 : index
    %1055 = memref.load %arg2[%c11_150] : memref<152xf32, #tpu.memory_space<smem>>
    %c17_151 = arith.constant 17 : index
    %1056 = memref.load %arg2[%c17_151] : memref<152xf32, #tpu.memory_space<smem>>
    %1057 = vector.broadcast %1054 : f32 to vector<1x128xf32>
    %1058 = arith.mulf %1057, %997 : vector<1x128xf32>
    %1059 = vector.broadcast %1055 : f32 to vector<1x128xf32>
    %1060 = arith.addf %1058, %1059 : vector<1x128xf32>
    %1061 = math.tanh %1060 : vector<1x128xf32>
    %1062 = vector.broadcast %1056 : f32 to vector<1x128xf32>
    %1063 = arith.mulf %1062, %1061 : vector<1x128xf32>
    %1064 = arith.addf %1053, %1063 : vector<1x128xf32>
    %c18_152 = arith.constant 18 : index
    %1065 = memref.load %arg2[%c18_152] : memref<152xf32, #tpu.memory_space<smem>>
    %1066 = vector.broadcast %1065 : f32 to vector<1x128xf32>
    %1067 = arith.addf %1064, %1066 : vector<1x128xf32>
    %1068 = arith.addf %926, %1067 : vector<1x128xf32>
    %c0_153 = arith.constant 0 : index
    %c0_154 = arith.constant 0 : index
    %c0_155 = arith.constant 0 : index
    %1069 = vector.load %arg3[%c0_153, %c0_154, %c0_155] : memref<2x1x128xf32, #tpu.memory_space<vmem>>, vector<1x1x128xf32>
    %1070 = vector.shape_cast %1069 : vector<1x1x128xf32> to vector<1x128xf32>
    %1071 = vector.shape_cast %1068 : vector<1x128xf32> to vector<1x1x128xf32>
    tpu.vector_store %arg3[%c0_153, %c0_154, %c0_155], %1071 {strides = array<i32>} : memref<2x1x128xf32, #tpu.memory_space<vmem>>, vector<1x1x128xf32>,
    %c1_156 = arith.constant 1 : index
    %c0_157 = arith.constant 0 : index
    %c0_158 = arith.constant 0 : index
    %1072 = vector.load %arg3[%c1_156, %c0_157, %c0_158] : memref<2x1x128xf32, #tpu.memory_space<vmem>>, vector<1x1x128xf32>
    %1073 = vector.shape_cast %1072 : vector<1x1x128xf32> to vector<1x128xf32>
    %1074 = vector.shape_cast %997 : vector<1x128xf32> to vector<1x1x128xf32>
    tpu.vector_store %arg3[%c1_156, %c0_157, %c0_158], %1074 {strides = array<i32>} : memref<2x1x128xf32, #tpu.memory_space<vmem>>, vector<1x1x128xf32>,
    return
  }
  func.func @transform_0(%arg0: i32) -> (i32, i32, i32) {
    %c0_i32 = arith.constant 0 : i32
    %c0_i32_0 = arith.constant 0 : i32
    %c0_i32_1 = arith.constant 0 : i32
    return %c0_i32, %arg0, %c0_i32_0 : i32, i32, i32
  }
  func.func @transform_1(%arg0: i32) -> i32 {
    %c0_i32 = arith.constant 0 : i32
    %c0_i32_0 = arith.constant 0 : i32
    return %c0_i32 : i32
  }
  func.func @transform_2(%arg0: i32) -> (i32, i32, i32) {
    %c0_i32 = arith.constant 0 : i32
    %c0_i32_0 = arith.constant 0 : i32
    %c0_i32_1 = arith.constant 0 : i32
    return %c0_i32, %arg0, %c0_i32_0 : i32, i32, i32
  }
}

</mosaic_0001>

<llo_original>
// kernel: lhi_forward.1
$region0: #{lhi_forward.1}
  #allocation0 [shape = 'u32[]', space=smem, size = 0x4, offset = 0x4, fixed_abs, tag = 'smem constant byte address 0x4 - core index']
  #allocation1 [shape = 'u32[72,128]{1,0:T(1,128)}', space=vmem, size = 0x9000, scoped, tag = 'internal scratch']
  %s0 = inlined_call_operand.vmem [shape: f32[2,1,128], index: 0, kind: input, shape index: {}]
  %s1 = inlined_call_operand.vmem [shape: f32[152], index: 1, kind: input, shape index: {}]
  %s2 = inlined_call_operand.vmem [shape: f32[2,1,128], index: 2, kind: output, shape index: {}]
  %s3 = sld [smem:[#allocation0]]
  $region22: #{lhi_forward.1} parent=0
    _
  %s5 = ssub.s32 1, %s3
  %s6 = scalar_select 0, %s5, %s3
  $region1: #{lhi_forward.1} parent=0
    #allocation2 [shape = 'u8[1024]{0}', space=smem, size = 0x400, scoped, tag = 'input window, operand 1, single buffered']
    #allocation3 [shape = 's32[1]{0}', space=sflag, size = 0x4, scoped, tag = 'scoped memory for lhi_forward.1']
    %7 = vsyncpa [#allocation3], 0
    // Predicated region
    $region2: #{lhi_forward.1} parent=1 // pred_check
      _
    $region3: #{lhi_forward.1} parent=1 // pred_check_branch
      %9 = sbr.rel (0) target = $region5
    $region4: #{lhi_forward.1} parent=1 // pred_region
      _
    $region5: #{lhi_forward.1} parent=1 // pred_fallthru
      _
    // Predicated region
    $region6: #{lhi_forward.1} parent=1 // pred_check
      _
    $region7: #{lhi_forward.1} parent=1 // pred_check_branch
      %11 = sbr.rel (0) target = $region9
    $region8: #{lhi_forward.1} parent=1 // pred_region
      %13 = vsyncadd [#allocation3], 0
      %s15 = sshll.u32 %s1, 4
      %s16 = int_to_ptr.vmem [resolvable:$true] %s15
      %18 = dma.vmem_to_smem %s16, 32, [#allocation2], [#allocation3]
    $region9: #{lhi_forward.1} parent=1 // pred_fallthru
      _
    // Predicated region
    $region10: #{lhi_forward.1} parent=1 // pred_check
      _
    $region11: #{lhi_forward.1} parent=1 // pred_check_branch
      %20 = sbr.rel (0) target = $region13
    $region12: #{lhi_forward.1} parent=1 // pred_region
      %22 = dma.done [#allocation3], 32
    $region13: #{lhi_forward.1} parent=1 // pred_fallthru
      _
    %23 = sfence
    %v24 = vld [vmem:[%s0] sm:$0x1]
    %s25 = scalar_lea.vmem %s0, 1
    %v26 = vld [vmem:[%s25] sm:$0x1]
    %s27 = sld [smem:[#allocation2]]
    %s28 = sld [smem:[#allocation2 + $0x6]]
    %s29 = sld [smem:[#allocation2 + $0xc]]
    %v30 = vstv %s27
    %v31 = vmul.f32 %v30, %v26
    %v32 = vstv %s28
    %v33 = vadd.f32 %v31, %v32
    %v34 = vtanh.pop %v33
    %v35 = vstv %s29
    %v36 = vmul.f32 %v35, %v34
    %v37 = vadd.f32 %v36, 0.0
    %s38 = sld [smem:[#allocation2 + $0x1]]
    %s39 = sld [smem:[#allocation2 + $0x7]]
    %s40 = sld [smem:[#allocation2 + $0xd]]
    %v41 = vstv %s38
    %v42 = vmul.f32 %v41, %v26
    %v43 = vstv %s39
    %v44 = vadd.f32 %v42, %v43
    %v45 = vtanh.pop %v44
    %v46 = vstv %s40
    %v47 = vmul.f32 %v46, %v45
    %v48 = vadd.f32 %v37, %v47
    %s49 = sld [smem:[#allocation2 + $0x2]]
    %s50 = sld [smem:[#allocation2 + $0x8]]
    %s51 = sld [smem:[#allocation2 + $0xe]]
    %v52 = vstv %s49
    %v53 = vmul.f32 %v52, %v26
    %v54 = vstv %s50
    %v55 = vadd.f32 %v53, %v54
    %v56 = vtanh.pop %v55
    %v57 = vstv %s51
    %v58 = vmul.f32 %v57, %v56
    %v59 = vadd.f32 %v48, %v58
    %s60 = sld [smem:[#allocation2 + $0x3]]
    %s61 = sld [smem:[#allocation2 + $0x9]]
    %s62 = sld [smem:[#allocation2 + $0xf]]
    %v63 = vstv %s60
    %v64 = vmul.f32 %v63, %v26
    %v65 = vstv %s61
    %v66 = vadd.f32 %v64, %v65
    %v67 = vtanh.pop %v66
    %v68 = vstv %s62
    %v69 = vmul.f32 %v68, %v67
    %v70 = vadd.f32 %v59, %v69
    %s71 = sld [smem:[#allocation2 + $0x4]]
    %s72 = sld [smem:[#allocation2 + $0xa]]
    %s73 = sld [smem:[#allocation2 + $0x10]]
    %v74 = vstv %s71
    %v75 = vmul.f32 %v74, %v26
    %v76 = vstv %s72
    %v77 = vadd.f32 %v75, %v76
    %v78 = vtanh.pop %v77
    %v79 = vstv %s73
    %v80 = vmul.f32 %v79, %v78
    %v81 = vadd.f32 %v70, %v80
    %s82 = sld [smem:[#allocation2 + $0x5]]
    %s83 = sld [smem:[#allocation2 + $0xb]]
    %s84 = sld [smem:[#allocation2 + $0x11]]
    %v85 = vstv %s82
    %v86 = vmul.f32 %v85, %v26
    %v87 = vstv %s83
    %v88 = vadd.f32 %v86, %v87
    %v89 = vtanh.pop %v88
    %v90 = vstv %s84
    %v91 = vmul.f32 %v90, %v89
    %v92 = vadd.f32 %v81, %v91
    %s93 = sld [smem:[#allocation2 + $0x12]]
    %v94 = vstv %s93
    %v95 = vadd.f32 %v92, %v94
    %v96 = vsub.f32 %v24, %v95
    %s97 = sld [smem:[#allocation2 + $0x13]]
    %s98 = sld [smem:[#allocation2 + $0x19]]
    %s99 = sld [smem:[#allocation2 + $0x1f]]
    %v100 = vstv %s97
    %v101 = vmul.f32 %v100, %v96
    %v102 = vstv %s98
    %v103 = vadd.f32 %v101, %v102
    %v104 = vtanh.pop %v103
    %v105 = vstv %s99
    %v106 = vmul.f32 %v105, %v104
    %v107 = vadd.f32 %v106, 0.0
    %s108 = sld [smem:[#allocation2 + $0x14]]
    %s109 = sld [smem:[#allocation2 + $0x1a]]
    %s110 = sld [smem:[#allocation2 + $0x20]]
    %v111 = vstv %s108
    %v112 = vmul.f32 %v111, %v96
    %v113 = vstv %s109
    %v114 = vadd.f32 %v112, %v113
    %v115 = vtanh.pop %v114
    %v116 = vstv %s110
    %v117 = vmul.f32 %v116, %v115
    %v118 = vadd.f32 %v107, %v117
    %s119 = sld [smem:[#allocation2 + $0x15]]
    %s120 = sld [smem:[#allocation2 + $0x1b]]
    %s121 = sld [smem:[#allocation2 + $0x21]]
    %v122 = vstv %s119
    %v123 = vmul.f32 %v122, %v96
    %v124 = vstv %s120
    %v125 = vadd.f32 %v123, %v124
    %v126 = vtanh.pop %v125
    %v127 = vstv %s121
    %v128 = vmul.f32 %v127, %v126
    %v129 = vadd.f32 %v118, %v128
    %s130 = sld [smem:[#allocation2 + $0x16]]
    %s131 = sld [smem:[#allocation2 + $0x1c]]
    %s132 = sld [smem:[#allocation2 + $0x22]]
    %v133 = vstv %s130
    %v134 = vmul.f32 %v133, %v96
    %v135 = vstv %s131
    %v136 = vadd.f32 %v134, %v135
    %v137 = vtanh.pop %v136
    %v138 = vstv %s132
    %v139 = vmul.f32 %v138, %v137
    %v140 = vadd.f32 %v129, %v139
    %s141 = sld [smem:[#allocation2 + $0x17]]
    %s142 = sld [smem:[#allocation2 + $0x1d]]
    %s143 = sld [smem:[#allocation2 + $0x23]]
    %v144 = vstv %s141
    %v145 = vmul.f32 %v144, %v96
    %v146 = vstv %s142
    %v147 = vadd.f32 %v145, %v146
    %v148 = vtanh.pop %v147
    %v149 = vstv %s143
    %v150 = vmul.f32 %v149, %v148
    %v151 = vadd.f32 %v140, %v150
    %s152 = sld [smem:[#allocation2 + $0x18]]
    %s153 = sld [smem:[#allocation2 + $0x1e]]
    %s154 = sld [smem:[#allocation2 + $0x24]]
    %v155 = vstv %s152
    %v156 = vmul.f32 %v155, %v96
    %v157 = vstv %s153
    %v158 = vadd.f32 %v156, %v157
    %v159 = vtanh.pop %v158
    %v160 = vstv %s154
    %v161 = vmul.f32 %v160, %v159
    %v162 = vadd.f32 %v151, %v161
    %s163 = sld [smem:[#allocation2 + $0x25]]
    %v164 = vstv %s163
    %v165 = vadd.f32 %v162, %v164
    %v166 = vadd.f32 %v26, %v165
    %v167 = vmul.f32 %v30, %v166
    %v168 = vadd.f32 %v167, %v32
    %v169 = vtanh.pop %v168
    %v170 = vmul.f32 %v35, %v169
    %v171 = vadd.f32 %v170, 0.0
    %v172 = vmul.f32 %v41, %v166
    %v173 = vadd.f32 %v172, %v43
    %v174 = vtanh.pop %v173
    %v175 = vmul.f32 %v46, %v174
    %v176 = vadd.f32 %v171, %v175
    %v177 = vmul.f32 %v52, %v166
    %v178 = vadd.f32 %v177, %v54
    %v179 = vtanh.pop %v178
    %v180 = vmul.f32 %v57, %v179
    %v181 = vadd.f32 %v176, %v180
    %v182 = vmul.f32 %v63, %v166
    %v183 = vadd.f32 %v182, %v65
    %v184 = vtanh.pop %v183
    %v185 = vmul.f32 %v68, %v184
    %v186 = vadd.f32 %v181, %v185
    %v187 = vmul.f32 %v74, %v166
    %v188 = vadd.f32 %v187, %v76
    %v189 = vtanh.pop %v188
    %v190 = vmul.f32 %v79, %v189
    %v191 = vadd.f32 %v186, %v190
    %v192 = vmul.f32 %v85, %v166
    %v193 = vadd.f32 %v192, %v87
    %v194 = vtanh.pop %v193
    %v195 = vmul.f32 %v90, %v194
    %v196 = vadd.f32 %v191, %v195
    %v197 = vadd.f32 %v196, %v94
    %v198 = vsub.f32 %v96, %v197
    %s199 = sld [smem:[#allocation2 + $0x26]]
    %s200 = sld [smem:[#allocation2 + $0x2c]]
    %s201 = sld [smem:[#allocation2 + $0x32]]
    %v202 = vstv %s199
    %v203 = vmul.f32 %v202, %v166
    %v204 = vstv %s200
    %v205 = vadd.f32 %v203, %v204
    %v206 = vtanh.pop %v205
    %v207 = vstv %s201
    %v208 = vmul.f32 %v207, %v206
    %v209 = vadd.f32 %v208, 0.0
    %s210 = sld [smem:[#allocation2 + $0x27]]
    %s211 = sld [smem:[#allocation2 + $0x2d]]
    %s212 = sld [smem:[#allocation2 + $0x33]]
    %v213 = vstv %s210
    %v214 = vmul.f32 %v213, %v166
    %v215 = vstv %s211
    %v216 = vadd.f32 %v214, %v215
    %v217 = vtanh.pop %v216
    %v218 = vstv %s212
    %v219 = vmul.f32 %v218, %v217
    %v220 = vadd.f32 %v209, %v219
    %s221 = sld [smem:[#allocation2 + $0x28]]
    %s222 = sld [smem:[#allocation2 + $0x2e]]
    %s223 = sld [smem:[#allocation2 + $0x34]]
    %v224 = vstv %s221
    %v225 = vmul.f32 %v224, %v166
    %v226 = vstv %s222
    %v227 = vadd.f32 %v225, %v226
    %v228 = vtanh.pop %v227
    %v229 = vstv %s223
    %v230 = vmul.f32 %v229, %v228
    %v231 = vadd.f32 %v220, %v230
    %s232 = sld [smem:[#allocation2 + $0x29]]
    %s233 = sld [smem:[#allocation2 + $0x2f]]
    %s234 = sld [smem:[#allocation2 + $0x35]]
    %v235 = vstv %s232
    %v236 = vmul.f32 %v235, %v166
    %v237 = vstv %s233
    %v238 = vadd.f32 %v236, %v237
    %v239 = vtanh.pop %v238
    %v240 = vstv %s234
    %v241 = vmul.f32 %v240, %v239
    %v242 = vadd.f32 %v231, %v241
    %s243 = sld [smem:[#allocation2 + $0x2a]]
    %s244 = sld [smem:[#allocation2 + $0x30]]
    %s245 = sld [smem:[#allocation2 + $0x36]]
    %v246 = vstv %s243
    %v247 = vmul.f32 %v246, %v166
    %v248 = vstv %s244
    %v249 = vadd.f32 %v247, %v248
    %v250 = vtanh.pop %v249
    %v251 = vstv %s245
    %v252 = vmul.f32 %v251, %v250
    %v253 = vadd.f32 %v242, %v252
    %s254 = sld [smem:[#allocation2 + $0x2b]]
    %s255 = sld [smem:[#allocation2 + $0x31]]
    %s256 = sld [smem:[#allocation2 + $0x37]]
    %v257 = vstv %s254
    %v258 = vmul.f32 %v257, %v166
    %v259 = vstv %s255
    %v260 = vadd.f32 %v258, %v259
    %v261 = vtanh.pop %v260
    %v262 = vstv %s256
    %v263 = vmul.f32 %v262, %v261
    %v264 = vadd.f32 %v253, %v263
    %s265 = sld [smem:[#allocation2 + $0x38]]
    %v266 = vstv %s265
    %v267 = vadd.f32 %v264, %v266
    %v268 = vsub.f32 %v198, %v267
    %s269 = sld [smem:[#allocation2 + $0x5f]]
    %s270 = sld [smem:[#allocation2 + $0x65]]
    %s271 = sld [smem:[#allocation2 + $0x6b]]
    %v272 = vstv %s269
    %v273 = vmul.f32 %v272, %v268
    %v274 = vstv %s270
    %v275 = vadd.f32 %v273, %v274
    %v276 = vtanh.pop %v275
    %v277 = vstv %s271
    %v278 = vmul.f32 %v277, %v276
    %v279 = vadd.f32 %v278, 0.0
    %s280 = sld [smem:[#allocation2 + $0x60]]
    %s281 = sld [smem:[#allocation2 + $0x66]]
    %s282 = sld [smem:[#allocation2 + $0x6c]]
    %v283 = vstv %s280
    %v284 = vmul.f32 %v283, %v268
    %v285 = vstv %s281
    %v286 = vadd.f32 %v284, %v285
    %v287 = vtanh.pop %v286
    %v288 = vstv %s282
    %v289 = vmul.f32 %v288, %v287
    %v290 = vadd.f32 %v279, %v289
    %s291 = sld [smem:[#allocation2 + $0x61]]
    %s292 = sld [smem:[#allocation2 + $0x67]]
    %s293 = sld [smem:[#allocation2 + $0x6d]]
    %v294 = vstv %s291
    %v295 = vmul.f32 %v294, %v268
    %v296 = vstv %s292
    %v297 = vadd.f32 %v295, %v296
    %v298 = vtanh.pop %v297
    %v299 = vstv %s293
    %v300 = vmul.f32 %v299, %v298
    %v301 = vadd.f32 %v290, %v300
    %s302 = sld [smem:[#allocation2 + $0x62]]
    %s303 = sld [smem:[#allocation2 + $0x68]]
    %s304 = sld [smem:[#allocation2 + $0x6e]]
    %v305 = vstv %s302
    %v306 = vmul.f32 %v305, %v268
    %v307 = vstv %s303
    %v308 = vadd.f32 %v306, %v307
    %v309 = vtanh.pop %v308
    %v310 = vstv %s304
    %v311 = vmul.f32 %v310, %v309
    %v312 = vadd.f32 %v301, %v311
    %s313 = sld [smem:[#allocation2 + $0x63]]
    %s314 = sld [smem:[#allocation2 + $0x69]]
    %s315 = sld [smem:[#allocation2 + $0x6f]]
    %v316 = vstv %s313
    %v317 = vmul.f32 %v316, %v268
    %v318 = vstv %s314
    %v319 = vadd.f32 %v317, %v318
    %v320 = vtanh.pop %v319
    %v321 = vstv %s315
    %v322 = vmul.f32 %v321, %v320
    %v323 = vadd.f32 %v312, %v322
    %s324 = sld [smem:[#allocation2 + $0x64]]
    %s325 = sld [smem:[#allocation2 + $0x6a]]
    %s326 = sld [smem:[#allocation2 + $0x70]]
    %v327 = vstv %s324
    %v328 = vmul.f32 %v327, %v268
    %v329 = vstv %s325
    %v330 = vadd.f32 %v328, %v329
    %v331 = vtanh.pop %v330
    %v332 = vstv %s326
    %v333 = vmul.f32 %v332, %v331
    %v334 = vadd.f32 %v323, %v333
    %s335 = sld [smem:[#allocation2 + $0x71]]
    %v336 = vstv %s335
    %v337 = vadd.f32 %v334, %v336
    %v338 = vadd.f32 %v166, %v337
    %v339 = vmul.f32 %v202, %v338
    %v340 = vadd.f32 %v339, %v204
    %v341 = vtanh.pop %v340
    %v342 = vmul.f32 %v207, %v341
    %v343 = vadd.f32 %v342, 0.0
    %v344 = vmul.f32 %v213, %v338
    %v345 = vadd.f32 %v344, %v215
    %v346 = vtanh.pop %v345
    %v347 = vmul.f32 %v218, %v346
    %v348 = vadd.f32 %v343, %v347
    %v349 = vmul.f32 %v224, %v338
    %v350 = vadd.f32 %v349, %v226
    %v351 = vtanh.pop %v350
    %v352 = vmul.f32 %v229, %v351
    %v353 = vadd.f32 %v348, %v352
    %v354 = vmul.f32 %v235, %v338
    %v355 = vadd.f32 %v354, %v237
    %v356 = vtanh.pop %v355
    %v357 = vmul.f32 %v240, %v356
    %v358 = vadd.f32 %v353, %v357
    %v359 = vmul.f32 %v246, %v338
    %v360 = vadd.f32 %v359, %v248
    %v361 = vtanh.pop %v360
    %v362 = vmul.f32 %v251, %v361
    %v363 = vadd.f32 %v358, %v362
    %v364 = vmul.f32 %v257, %v338
    %v365 = vadd.f32 %v364, %v259
    %v366 = vtanh.pop %v365
    %v367 = vmul.f32 %v262, %v366
    %v368 = vadd.f32 %v363, %v367
    %v369 = vadd.f32 %v368, %v266
    %v370 = vsub.f32 %v268, %v369
    %s371 = sld [smem:[#allocation2 + $0x39]]
    %s372 = sld [smem:[#allocation2 + $0x3f]]
    %s373 = sld [smem:[#allocation2 + $0x45]]
    %v374 = vstv %s371
    %v375 = vmul.f32 %v374, %v338
    %v376 = vstv %s372
    %v377 = vadd.f32 %v375, %v376
    %v378 = vtanh.pop %v377
    %v379 = vstv %s373
    %v380 = vmul.f32 %v379, %v378
    %v381 = vadd.f32 %v380, 0.0
    %s382 = sld [smem:[#allocation2 + $0x3a]]
    %s383 = sld [smem:[#allocation2 + $0x40]]
    %s384 = sld [smem:[#allocation2 + $0x46]]
    %v385 = vstv %s382
    %v386 = vmul.f32 %v385, %v338
    %v387 = vstv %s383
    %v388 = vadd.f32 %v386, %v387
    %v389 = vtanh.pop %v388
    %v390 = vstv %s384
    %v391 = vmul.f32 %v390, %v389
    %v392 = vadd.f32 %v381, %v391
    %s393 = sld [smem:[#allocation2 + $0x3b]]
    %s394 = sld [smem:[#allocation2 + $0x41]]
    %s395 = sld [smem:[#allocation2 + $0x47]]
    %v396 = vstv %s393
    %v397 = vmul.f32 %v396, %v338
    %v398 = vstv %s394
    %v399 = vadd.f32 %v397, %v398
    %v400 = vtanh.pop %v399
    %v401 = vstv %s395
    %v402 = vmul.f32 %v401, %v400
    %v403 = vadd.f32 %v392, %v402
    %s404 = sld [smem:[#allocation2 + $0x3c]]
    %s405 = sld [smem:[#allocation2 + $0x42]]
    %s406 = sld [smem:[#allocation2 + $0x48]]
    %v407 = vstv %s404
    %v408 = vmul.f32 %v407, %v338
    %v409 = vstv %s405
    %v410 = vadd.f32 %v408, %v409
    %v411 = vtanh.pop %v410
    %v412 = vstv %s406
    %v413 = vmul.f32 %v412, %v411
    %v414 = vadd.f32 %v403, %v413
    %s415 = sld [smem:[#allocation2 + $0x3d]]
    %s416 = sld [smem:[#allocation2 + $0x43]]
    %s417 = sld [smem:[#allocation2 + $0x49]]
    %v418 = vstv %s415
    %v419 = vmul.f32 %v418, %v338
    %v420 = vstv %s416
    %v421 = vadd.f32 %v419, %v420
    %v422 = vtanh.pop %v421
    %v423 = vstv %s417
    %v424 = vmul.f32 %v423, %v422
    %v425 = vadd.f32 %v414, %v424
    %s426 = sld [smem:[#allocation2 + $0x3e]]
    %s427 = sld [smem:[#allocation2 + $0x44]]
    %s428 = sld [smem:[#allocation2 + $0x4a]]
    %v429 = vstv %s426
    %v430 = vmul.f32 %v429, %v338
    %v431 = vstv %s427
    %v432 = vadd.f32 %v430, %v431
    %v433 = vtanh.pop %v432
    %v434 = vstv %s428
    %v435 = vmul.f32 %v434, %v433
    %v436 = vadd.f32 %v425, %v435
    %s437 = sld [smem:[#allocation2 + $0x4b]]
    %v438 = vstv %s437
    %v439 = vadd.f32 %v436, %v438
    %v440 = vsub.f32 %v370, %v439
    %s441 = sld [smem:[#allocation2 + $0x72]]
    %s442 = sld [smem:[#allocation2 + $0x78]]
    %s443 = sld [smem:[#allocation2 + $0x7e]]
    %v444 = vstv %s441
    %v445 = vmul.f32 %v444, %v440
    %v446 = vstv %s442
    %v447 = vadd.f32 %v445, %v446
    %v448 = vtanh.pop %v447
    %v449 = vstv %s443
    %v450 = vmul.f32 %v449, %v448
    %v451 = vadd.f32 %v450, 0.0
    %s452 = sld [smem:[#allocation2 + $0x73]]
    %s453 = sld [smem:[#allocation2 + $0x79]]
    %s454 = sld [smem:[#allocation2 + $0x7f]]
    %v455 = vstv %s452
    %v456 = vmul.f32 %v455, %v440
    %v457 = vstv %s453
    %v458 = vadd.f32 %v456, %v457
    %v459 = vtanh.pop %v458
    %v460 = vstv %s454
    %v461 = vmul.f32 %v460, %v459
    %v462 = vadd.f32 %v451, %v461
    %s463 = sld [smem:[#allocation2 + $0x74]]
    %s464 = sld [smem:[#allocation2 + $0x7a]]
    %s465 = sld [smem:[#allocation2 + $0x80]]
    %v466 = vstv %s463
    %v467 = vmul.f32 %v466, %v440
    %v468 = vstv %s464
    %v469 = vadd.f32 %v467, %v468
    %v470 = vtanh.pop %v469
    %v471 = vstv %s465
    %v472 = vmul.f32 %v471, %v470
    %v473 = vadd.f32 %v462, %v472
    %s474 = sld [smem:[#allocation2 + $0x75]]
    %s475 = sld [smem:[#allocation2 + $0x7b]]
    %s476 = sld [smem:[#allocation2 + $0x81]]
    %v477 = vstv %s474
    %v478 = vmul.f32 %v477, %v440
    %v479 = vstv %s475
    %v480 = vadd.f32 %v478, %v479
    %v481 = vtanh.pop %v480
    %v482 = vstv %s476
    %v483 = vmul.f32 %v482, %v481
    %v484 = vadd.f32 %v473, %v483
    %s485 = sld [smem:[#allocation2 + $0x76]]
    %s486 = sld [smem:[#allocation2 + $0x7c]]
    %s487 = sld [smem:[#allocation2 + $0x82]]
    %v488 = vstv %s485
    %v489 = vmul.f32 %v488, %v440
    %v490 = vstv %s486
    %v491 = vadd.f32 %v489, %v490
    %v492 = vtanh.pop %v491
    %v493 = vstv %s487
    %v494 = vmul.f32 %v493, %v492
    %v495 = vadd.f32 %v484, %v494
    %s496 = sld [smem:[#allocation2 + $0x77]]
    %s497 = sld [smem:[#allocation2 + $0x7d]]
    %s498 = sld [smem:[#allocation2 + $0x83]]
    %v499 = vstv %s496
    %v500 = vmul.f32 %v499, %v440
    %v501 = vstv %s497
    %v502 = vadd.f32 %v500, %v501
    %v503 = vtanh.pop %v502
    %v504 = vstv %s498
    %v505 = vmul.f32 %v504, %v503
    %v506 = vadd.f32 %v495, %v505
    %s507 = sld [smem:[#allocation2 + $0x84]]
    %v508 = vstv %s507
    %v509 = vadd.f32 %v506, %v508
    %v510 = vadd.f32 %v338, %v509
    %v511 = vmul.f32 %v374, %v510
    %v512 = vadd.f32 %v511, %v376
    %v513 = vtanh.pop %v512
    %v514 = vmul.f32 %v379, %v513
    %v515 = vadd.f32 %v514, 0.0
    %v516 = vmul.f32 %v385, %v510
    %v517 = vadd.f32 %v516, %v387
    %v518 = vtanh.pop %v517
    %v519 = vmul.f32 %v390, %v518
    %v520 = vadd.f32 %v515, %v519
    %v521 = vmul.f32 %v396, %v510
    %v522 = vadd.f32 %v521, %v398
    %v523 = vtanh.pop %v522
    %v524 = vmul.f32 %v401, %v523
    %v525 = vadd.f32 %v520, %v524
    %v526 = vmul.f32 %v407, %v510
    %v527 = vadd.f32 %v526, %v409
    %v528 = vtanh.pop %v527
    %v529 = vmul.f32 %v412, %v528
    %v530 = vadd.f32 %v525, %v529
    %v531 = vmul.f32 %v418, %v510
    %v532 = vadd.f32 %v531, %v420
    %v533 = vtanh.pop %v532
    %v534 = vmul.f32 %v423, %v533
    %v535 = vadd.f32 %v530, %v534
    %v536 = vmul.f32 %v429, %v510
    %v537 = vadd.f32 %v536, %v431
    %v538 = vtanh.pop %v537
    %v539 = vmul.f32 %v434, %v538
    %v540 = vadd.f32 %v535, %v539
    %v541 = vadd.f32 %v540, %v438
    %v542 = vsub.f32 %v440, %v541
    %s543 = sld [smem:[#allocation2 + $0x4c]]
    %s544 = sld [smem:[#allocation2 + $0x52]]
    %s545 = sld [smem:[#allocation2 + $0x58]]
    %v546 = vstv %s543
    %v547 = vmul.f32 %v546, %v510
    %v548 = vstv %s544
    %v549 = vadd.f32 %v547, %v548
    %v550 = vtanh.pop %v549
    %v551 = vstv %s545
    %v552 = vmul.f32 %v551, %v550
    %v553 = vadd.f32 %v552, 0.0
    %s554 = sld [smem:[#allocation2 + $0x4d]]
    %s555 = sld [smem:[#allocation2 + $0x53]]
    %s556 = sld [smem:[#allocation2 + $0x59]]
    %v557 = vstv %s554
    %v558 = vmul.f32 %v557, %v510
    %v559 = vstv %s555
    %v560 = vadd.f32 %v558, %v559
    %v561 = vtanh.pop %v560
    %v562 = vstv %s556
    %v563 = vmul.f32 %v562, %v561
    %v564 = vadd.f32 %v553, %v563
    %s565 = sld [smem:[#allocation2 + $0x4e]]
    %s566 = sld [smem:[#allocation2 + $0x54]]
    %s567 = sld [smem:[#allocation2 + $0x5a]]
    %v568 = vstv %s565
    %v569 = vmul.f32 %v568, %v510
    %v570 = vstv %s566
    %v571 = vadd.f32 %v569, %v570
    %v572 = vtanh.pop %v571
    %v573 = vstv %s567
    %v574 = vmul.f32 %v573, %v572
    %v575 = vadd.f32 %v564, %v574
    %s576 = sld [smem:[#allocation2 + $0x4f]]
    %s577 = sld [smem:[#allocation2 + $0x55]]
    %s578 = sld [smem:[#allocation2 + $0x5b]]
    %v579 = vstv %s576
    %v580 = vmul.f32 %v579, %v510
    %v581 = vstv %s577
    %v582 = vadd.f32 %v580, %v581
    %v583 = vtanh.pop %v582
    %v584 = vstv %s578
    %v585 = vmul.f32 %v584, %v583
    %v586 = vadd.f32 %v575, %v585
    %s587 = sld [smem:[#allocation2 + $0x50]]
    %s588 = sld [smem:[#allocation2 + $0x56]]
    %s589 = sld [smem:[#allocation2 + $0x5c]]
    %v590 = vstv %s587
    %v591 = vmul.f32 %v590, %v510
    %v592 = vstv %s588
    %v593 = vadd.f32 %v591, %v592
    %v594 = vtanh.pop %v593
    %v595 = vstv %s589
    %v596 = vmul.f32 %v595, %v594
    %v597 = vadd.f32 %v586, %v596
    %s598 = sld [smem:[#allocation2 + $0x51]]
    %s599 = sld [smem:[#allocation2 + $0x57]]
    %s600 = sld [smem:[#allocation2 + $0x5d]]
    %v601 = vstv %s598
    %v602 = vmul.f32 %v601, %v510
    %v603 = vstv %s599
    %v604 = vadd.f32 %v602, %v603
    %v605 = vtanh.pop %v604
    %v606 = vstv %s600
    %v607 = vmul.f32 %v606, %v605
    %v608 = vadd.f32 %v597, %v607
    %s609 = sld [smem:[#allocation2 + $0x5e]]
    %v610 = vstv %s609
    %v611 = vadd.f32 %v608, %v610
    %v612 = vsub.f32 %v542, %v611
    %s613 = sld [smem:[#allocation2 + $0x85]]
    %s614 = sld [smem:[#allocation2 + $0x8b]]
    %s615 = sld [smem:[#allocation2 + $0x91]]
    %v616 = vstv %s613
    %v617 = vmul.f32 %v616, %v612
    %v618 = vstv %s614
    %v619 = vadd.f32 %v617, %v618
    %v620 = vtanh.pop %v619
    %v621 = vstv %s615
    %v622 = vmul.f32 %v621, %v620
    %v623 = vadd.f32 %v622, 0.0
    %s624 = sld [smem:[#allocation2 + $0x86]]
    %s625 = sld [smem:[#allocation2 + $0x8c]]
    %s626 = sld [smem:[#allocation2 + $0x92]]
    %v627 = vstv %s624
    %v628 = vmul.f32 %v627, %v612
    %v629 = vstv %s625
    %v630 = vadd.f32 %v628, %v629
    %v631 = vtanh.pop %v630
    %v632 = vstv %s626
    %v633 = vmul.f32 %v632, %v631
    %v634 = vadd.f32 %v623, %v633
    %s635 = sld [smem:[#allocation2 + $0x87]]
    %s636 = sld [smem:[#allocation2 + $0x8d]]
    %s637 = sld [smem:[#allocation2 + $0x93]]
    %v638 = vstv %s635
    %v639 = vmul.f32 %v638, %v612
    %v640 = vstv %s636
    %v641 = vadd.f32 %v639, %v640
    %v642 = vtanh.pop %v641
    %v643 = vstv %s637
    %v644 = vmul.f32 %v643, %v642
    %v645 = vadd.f32 %v634, %v644
    %s646 = sld [smem:[#allocation2 + $0x88]]
    %s647 = sld [smem:[#allocation2 + $0x8e]]
    %s648 = sld [smem:[#allocation2 + $0x94]]
    %v649 = vstv %s646
    %v650 = vmul.f32 %v649, %v612
    %v651 = vstv %s647
    %v652 = vadd.f32 %v650, %v651
    %v653 = vtanh.pop %v652
    %v654 = vstv %s648
    %v655 = vmul.f32 %v654, %v653
    %v656 = vadd.f32 %v645, %v655
    %s657 = sld [smem:[#allocation2 + $0x89]]
    %s658 = sld [smem:[#allocation2 + $0x8f]]
    %s659 = sld [smem:[#allocation2 + $0x95]]
    %v660 = vstv %s657
    %v661 = vmul.f32 %v660, %v612
    %v662 = vstv %s658
    %v663 = vadd.f32 %v661, %v662
    %v664 = vtanh.pop %v663
    %v665 = vstv %s659
    %v666 = vmul.f32 %v665, %v664
    %v667 = vadd.f32 %v656, %v666
    %s668 = sld [smem:[#allocation2 + $0x8a]]
    %s669 = sld [smem:[#allocation2 + $0x90]]
    %s670 = sld [smem:[#allocation2 + $0x96]]
    %v671 = vstv %s668
    %v672 = vmul.f32 %v671, %v612
    %v673 = vstv %s669
    %v674 = vadd.f32 %v672, %v673
    %v675 = vtanh.pop %v674
    %v676 = vstv %s670
    %v677 = vmul.f32 %v676, %v675
    %v678 = vadd.f32 %v667, %v677
    %s679 = sld [smem:[#allocation2 + $0x97]]
    %v680 = vstv %s679
    %v681 = vadd.f32 %v678, %v680
    %v682 = vadd.f32 %v510, %v681
    %v683 = vmul.f32 %v546, %v682
    %v684 = vadd.f32 %v683, %v548
    %v685 = vtanh.pop %v684
    %v686 = vmul.f32 %v551, %v685
    %v687 = vadd.f32 %v686, 0.0
    %v688 = vmul.f32 %v557, %v682
    %v689 = vadd.f32 %v688, %v559
    %v690 = vtanh.pop %v689
    %v691 = vmul.f32 %v562, %v690
    %v692 = vadd.f32 %v687, %v691
    %v693 = vmul.f32 %v568, %v682
    %v694 = vadd.f32 %v693, %v570
    %v695 = vtanh.pop %v694
    %v696 = vmul.f32 %v573, %v695
    %v697 = vadd.f32 %v692, %v696
    %v698 = vmul.f32 %v579, %v682
    %v699 = vadd.f32 %v698, %v581
    %v700 = vtanh.pop %v699
    %v701 = vmul.f32 %v584, %v700
    %v702 = vadd.f32 %v697, %v701
    %v703 = vmul.f32 %v590, %v682
    %v704 = vadd.f32 %v703, %v592
    %v705 = vtanh.pop %v704
    %v706 = vmul.f32 %v595, %v705
    %v707 = vadd.f32 %v702, %v706
    %v708 = vmul.f32 %v601, %v682
    %v709 = vadd.f32 %v708, %v603
    %v710 = vtanh.pop %v709
    %v711 = vmul.f32 %v606, %v710
    %v712 = vadd.f32 %v707, %v711
    %v713 = vadd.f32 %v712, %v610
    %v714 = vsub.f32 %v612, %v713
    %v715 = vmul.f32 %v30, %v682
    %v716 = vadd.f32 %v715, %v32
    %v717 = vtanh.pop %v716
    %v718 = vmul.f32 %v35, %v717
    %v719 = vadd.f32 %v718, 0.0
    %v720 = vmul.f32 %v41, %v682
    %v721 = vadd.f32 %v720, %v43
    %v722 = vtanh.pop %v721
    %v723 = vmul.f32 %v46, %v722
    %v724 = vadd.f32 %v719, %v723
    %v725 = vmul.f32 %v52, %v682
    %v726 = vadd.f32 %v725, %v54
    %v727 = vtanh.pop %v726
    %v728 = vmul.f32 %v57, %v727
    %v729 = vadd.f32 %v724, %v728
    %v730 = vmul.f32 %v63, %v682
    %v731 = vadd.f32 %v730, %v65
    %v732 = vtanh.pop %v731
    %v733 = vmul.f32 %v68, %v732
    %v734 = vadd.f32 %v729, %v733
    %v735 = vmul.f32 %v74, %v682
    %v736 = vadd.f32 %v735, %v76
    %v737 = vtanh.pop %v736
    %v738 = vmul.f32 %v79, %v737
    %v739 = vadd.f32 %v734, %v738
    %v740 = vmul.f32 %v85, %v682
    %v741 = vadd.f32 %v740, %v87
    %v742 = vtanh.pop %v741
    %v743 = vmul.f32 %v90, %v742
    %v744 = vadd.f32 %v739, %v743
    %v745 = vadd.f32 %v744, %v94
    %v746 = vadd.f32 %v714, %v745
    %v747 = vmul.f32 %v100, %v746
    %v748 = vadd.f32 %v747, %v102
    %v749 = vtanh.pop %v748
    %v750 = vmul.f32 %v105, %v749
    %v751 = vadd.f32 %v750, 0.0
    %v752 = vmul.f32 %v111, %v746
    %v753 = vadd.f32 %v752, %v113
    %v754 = vtanh.pop %v753
    %v755 = vmul.f32 %v116, %v754
    %v756 = vadd.f32 %v751, %v755
    %v757 = vmul.f32 %v122, %v746
    %v758 = vadd.f32 %v757, %v124
    %v759 = vtanh.pop %v758
    %v760 = vmul.f32 %v127, %v759
    %v761 = vadd.f32 %v756, %v760
    %v762 = vmul.f32 %v133, %v746
    %v763 = vadd.f32 %v762, %v135
    %v764 = vtanh.pop %v763
    %v765 = vmul.f32 %v138, %v764
    %v766 = vadd.f32 %v761, %v765
    %v767 = vmul.f32 %v144, %v746
    %v768 = vadd.f32 %v767, %v146
    %v769 = vtanh.pop %v768
    %v770 = vmul.f32 %v149, %v769
    %v771 = vadd.f32 %v766, %v770
    %v772 = vmul.f32 %v155, %v746
    %v773 = vadd.f32 %v772, %v157
    %v774 = vtanh.pop %v773
    %v775 = vmul.f32 %v160, %v774
    %v776 = vadd.f32 %v771, %v775
    %v777 = vadd.f32 %v776, %v164
    %v778 = vsub.f32 %v682, %v777
    %v779 = vmul.f32 %v30, %v778
    %v780 = vadd.f32 %v779, %v32
    %v781 = vtanh.pop %v780
    %v782 = vmul.f32 %v35, %v781
    %v783 = vadd.f32 %v782, 0.0
    %v784 = vmul.f32 %v41, %v778
    %v785 = vadd.f32 %v784, %v43
    %v786 = vtanh.pop %v785
    %v787 = vmul.f32 %v46, %v786
    %v788 = vadd.f32 %v783, %v787
    %v789 = vmul.f32 %v52, %v778
    %v790 = vadd.f32 %v789, %v54
    %v791 = vtanh.pop %v790
    %v792 = vmul.f32 %v57, %v791
    %v793 = vadd.f32 %v788, %v792
    %v794 = vmul.f32 %v63, %v778
    %v795 = vadd.f32 %v794, %v65
    %v796 = vtanh.pop %v795
    %v797 = vmul.f32 %v68, %v796
    %v798 = vadd.f32 %v793, %v797
    %v799 = vmul.f32 %v74, %v778
    %v800 = vadd.f32 %v799, %v76
    %v801 = vtanh.pop %v800
    %v802 = vmul.f32 %v79, %v801
    %v803 = vadd.f32 %v798, %v802
    %v804 = vmul.f32 %v85, %v778
    %v805 = vadd.f32 %v804, %v87
    %v806 = vtanh.pop %v805
    %v807 = vmul.f32 %v90, %v806
    %v808 = vadd.f32 %v803, %v807
    %v809 = vadd.f32 %v808, %v94
    %v810 = vadd.f32 %v746, %v809
    %811 = vst [vmem:[%s2] sm:$0x1] %v810
    %s812 = scalar_lea.vmem %s2, 1
    %813 = vst [vmem:[%s812] sm:$0x1] %v778
    // Predicated region
    $region14: #{lhi_forward.1} parent=1 // pred_check
      _
    $region15: #{lhi_forward.1} parent=1 // pred_check_branch
      %815 = sbr.rel (0) target = $region17
    $region16: #{lhi_forward.1} parent=1 // pred_region
      _
    $region17: #{lhi_forward.1} parent=1 // pred_fallthru
      _
    // Predicated region
    $region18: #{lhi_forward.1} parent=1 // pred_check
      _
    $region19: #{lhi_forward.1} parent=1 // pred_check_branch
      %817 = sbr.rel (0) target = $region21
    $region20: #{lhi_forward.1} parent=1 // pred_region
      _
    $region21: #{lhi_forward.1} parent=1 // pred_fallthru
      _
    %818 = vsyncpa [#allocation3], 1

</llo_original>
